<compile_context>
chip_gen: v7x
topology: tpu7x:2x2x1
jax: 0.10.0
libtpu: 0.0.40
codegen_flags: <defaults>
</compile_context>

<pallas_src>
import functools

import jax
import jax.numpy as jnp
from jax import lax
from jax.experimental import pallas as pl
from jax.experimental.pallas import tpu as pltpu


# -----------------------------------------------------------------------------
# Pallas kernels
# -----------------------------------------------------------------------------
def _fc_kernel(x_ref, w_ref, b_ref, o_ref):
    """o = x @ w + b.  Lane-dense: N = 4*4*nf (=256) sits on lanes."""
    acc = jnp.dot(x_ref[...], w_ref[...], preferred_element_type=jnp.float32)
    acc = acc + b_ref[...]
    o_ref[...] = acc.astype(o_ref.dtype)


def _convt_relu_bn_kernel(col_ref, w_ref, b_ref, g_ref, beta_ref, o_ref):
    """Fused ConvTranspose (im2col matmul) + bias + ReLU + BatchNorm2d.

    col_ref  : (K*K*Ci, M) bf16, M = B*Ho*Wo   (spatial axis on lanes)
    w_ref    : (Co, K*K*Ci) bf16
    b/g/beta : (Co, 1) f32
    o_ref    : (Co, M)
    """
    y = jnp.dot(w_ref[...], col_ref[...], preferred_element_type=jnp.float32)
    y = jnp.maximum(y + b_ref[...], 0.0)                      # bias + ReLU (f32)
    # Training-mode BatchNorm2d: reduce over (B, H, W) == the lane axis here.
    m = y.shape[1]
    mean = jnp.sum(y, axis=1, keepdims=True) * (1.0 / m)
    yc = y - mean
    var = jnp.sum(yc * yc, axis=1, keepdims=True) * (1.0 / m)  # biased variance
    y = yc * lax.rsqrt(var + 1e-5) * g_ref[...] + beta_ref[...]
    o_ref[...] = y.astype(o_ref.dtype)


def _convt_tanh_kernel(col_ref, w_ref, b_ref, o_ref):
    """Fused final ConvTranspose (im2col matmul) + bias + tanh.  Tiled over M."""
    y = jnp.dot(w_ref[...], col_ref[...], preferred_element_type=jnp.float32)
    o_ref[...] = jnp.tanh(y + b_ref[...]).astype(o_ref.dtype)


# -----------------------------------------------------------------------------
# pallas_call wrappers
# -----------------------------------------------------------------------------
def fc_forward(z, w_t, b):
    """z: (B, In) ; w_t: (In, N) bf16 ; b: (1, N) f32  ->  (B, N) bf16."""
    B, In = z.shape
    N = w_t.shape[1]
    return pl.pallas_call(
        _fc_kernel,
        out_shape=jax.ShapeDtypeStruct((B, N), jnp.bfloat16),
        grid=(1,),
        in_specs=[
            pl.BlockSpec((B, In), lambda i: (0, 0)),
            pl.BlockSpec((In, N), lambda i: (0, 0)),
            pl.BlockSpec((1, N), lambda i: (0, 0)),
        ],
        out_specs=pl.BlockSpec((B, N), lambda i: (0, 0)),
        compiler_params=pltpu.CompilerParams(
            dimension_semantics=("arbitrary",)),
    )(z.astype(jnp.bfloat16), w_t, b)


def convt_relu_bn(col, w_mat, bias, gamma, beta):
    """col: (K*K*Ci, M) bf16; w_mat: (Co, K*K*Ci) bf16  ->  (Co, M) bf16.

    Whole layer (matmul + bias + ReLU + BatchNorm) in a single kernel; the full
    output (< 64 KiB here) stays resident in VMEM for the BN reduction.
    """
    KKCi, M = col.shape
    Co = w_mat.shape[0]
    return pl.pallas_call(
        _convt_relu_bn_kernel,
        out_shape=jax.ShapeDtypeStruct((Co, M), jnp.bfloat16),
        grid=(1,),
        in_specs=[
            pl.BlockSpec((KKCi, M), lambda i: (0, 0)),
            pl.BlockSpec((Co, KKCi), lambda i: (0, 0)),
            pl.BlockSpec((Co, 1), lambda i: (0, 0)),
            pl.BlockSpec((Co, 1), lambda i: (0, 0)),
            pl.BlockSpec((Co, 1), lambda i: (0, 0)),
        ],
        out_specs=pl.BlockSpec((Co, M), lambda i: (0, 0)),
        compiler_params=pltpu.CompilerParams(
            dimension_semantics=("arbitrary",)),
    )(col, w_mat, bias, gamma, beta)


def convt_tanh(col, w_mat, bias, *, tile_m=512):
    """Final layer: col (K*K*Ci, M) bf16 -> (Co, M) f32, tiled & parallel over M."""
    KKCi, M = col.shape
    Co = w_mat.shape[0]
    if M % tile_m != 0 or tile_m % 128 != 0:
        tile_m = M                      # tiny / odd shapes: single full tile
    grid_m = M // tile_m
    return pl.pallas_call(
        _convt_tanh_kernel,
        out_shape=jax.ShapeDtypeStruct((Co, M), jnp.float32),
        grid=(grid_m,),
        in_specs=[
            pl.BlockSpec((KKCi, tile_m), lambda i: (0, i)),
            pl.BlockSpec((Co, KKCi), lambda i: (0, 0)),
            pl.BlockSpec((Co, 1), lambda i: (0, 0)),
        ],
        out_specs=pl.BlockSpec((Co, tile_m), lambda i: (0, i)),
        compiler_params=pltpu.CompilerParams(
            dimension_semantics=("parallel",)),
    )(col, w_mat, bias)


# -----------------------------------------------------------------------------
# ConvTranspose2d glue: zero-insertion upsample + pad + im2col, in the
# channels-first (C, B*H*W) layout (no transposes, bf16 buffers).
# -----------------------------------------------------------------------------
def _upsample_pad_im2col(x_cm, B, H, W, K, stride, padding):
    """x_cm: (Ci, B*H*W) -> (col, Ho, Wo) with col (K*K*Ci, B*Ho*Wo) bf16.

    Column ordering is (b, ho, wo); row ordering is ((kh, kw), ci), matching
    the prepared (Co, K*K*Ci) weight matrices.
    """
    Ci = x_cm.shape[0]
    x = x_cm.reshape(Ci, B, H, W).astype(jnp.bfloat16)
    Hu, Wu = (H - 1) * stride + 1, (W - 1) * stride + 1
    p = K - 1 - padding
    Ho, Wo = Hu + 2 * p - K + 1, Wu + 2 * p - K + 1   # == (H-1)*s - 2*pad + K
    xp = jnp.zeros((Ci, B, Hu + 2 * p, Wu + 2 * p), jnp.bfloat16)
    xp = xp.at[:, :, p:p + Hu:stride, p:p + Wu:stride].set(x)
    # TODO(synk): the zero-insertion scatter + K*K shifted-slice gather stays
    # as XLA glue; fusing it in-kernel needs strided 4-D slice + repack that
    # Mosaic does not lower cleanly for these sub-lane-sized spatial dims.
    taps = [xp[:, :, kh:kh + Ho, kw:kw + Wo]
            for kh in range(K) for kw in range(K)]     # each (Ci, B, Ho, Wo)
    col = jnp.stack(taps, axis=0)                      # (K*K, Ci, B, Ho, Wo)
    return col.reshape(K * K * Ci, B * Ho * Wo), Ho, Wo


# -----------------------------------------------------------------------------
# Parameters
# -----------------------------------------------------------------------------
def init_params(key, input_size, num_filters, kernel_n, nb_channels):
    ks = jax.random.split(key, 8)
    s = 0.05
    nf, nf2 = num_filters, num_filters // 2
    return {
        # nn.Linear(input_size, 4*4*nf): weight is (out, in)
        "fc_w": s * jax.random.normal(ks[0], (4 * 4 * nf, input_size), jnp.float32),
        "fc_b": s * jax.random.normal(ks[1], (4 * 4 * nf,), jnp.float32),
        # ConvTranspose2d weights are (C_in, C_out, K, K)
        "w1": s * jax.random.normal(ks[2], (nf, nf, kernel_n, kernel_n), jnp.float32),
        "b1": s * jax.random.normal(ks[3], (nf,), jnp.float32),
        "g1": jnp.ones((nf,), jnp.float32),
        "be1": jnp.zeros((nf,), jnp.float32),
        "w2": s * jax.random.normal(ks[4], (nf, nf2, kernel_n, kernel_n), jnp.float32),
        "b2": s * jax.random.normal(ks[5], (nf2,), jnp.float32),
        "g2": jnp.ones((nf2,), jnp.float32),
        "be2": jnp.zeros((nf2,), jnp.float32),
        "w3": s * jax.random.normal(ks[6], (nf2, nb_channels, kernel_n, kernel_n),
                                    jnp.float32),
        "b3": s * jax.random.normal(ks[7], (nb_channels,), jnp.float32),
    }


def _convt_weight_matrix(w_t):
    """PyTorch ConvTranspose2d weight (Ci, Co, K, K) -> (Co, K*K*Ci) bf16 for
    the equivalent stride-1 regular conv (spatial flip + channel swap)."""
    Ci, Co, K, _ = w_t.shape
    w = w_t[:, :, ::-1, ::-1]                      # spatial flip
    w = jnp.transpose(w, (2, 3, 0, 1))             # (K, K, Ci, Co)
    w = w.reshape(K * K * Ci, Co)                  # rows ordered ((kh,kw), ci)
    return jnp.transpose(w).astype(jnp.bfloat16)   # (Co, K*K*Ci)


def prepare_params(params):
    """One-time weight re-layout, hoisted out of the per-step forward."""
    col = lambda v: v.reshape(-1, 1).astype(jnp.float32)
    return {
        "fc_wt": jnp.transpose(params["fc_w"]).astype(jnp.bfloat16),  # (In, 4*4*nf)
        "fc_b": params["fc_b"].reshape(1, -1).astype(jnp.float32),
        "w1": _convt_weight_matrix(params["w1"]), "b1": col(params["b1"]),
        "g1": col(params["g1"]), "be1": col(params["be1"]),
        "w2": _convt_weight_matrix(params["w2"]), "b2": col(params["b2"]),
        "g2": col(params["g2"]), "be2": col(params["be2"]),
        "w3": _convt_weight_matrix(params["w3"]), "b3": col(params["b3"]),
    }


# -----------------------------------------------------------------------------
# ConvGenerator forward
# -----------------------------------------------------------------------------
def conv_generator_forward(z, prep, *, num_filters, kernel_n, stride, nb_channels):
    B = z.shape[0]
    nf = num_filters
    K = kernel_n

    # fc: (B, In) -> (B, 4*4*nf)  (lane-dense on the 4*4*nf axis)
    fake = fc_forward(z, prep["fc_wt"], prep["fc_b"])                 # (B, 16*nf)
    # view(-1, nf, 4, 4), then switch once to the channels-first matrix layout
    # (nf, B*4*4) that every subsequent layer consumes and produces.
    x = fake.reshape(B, nf, 16).transpose(1, 0, 2).reshape(nf, B * 16)
    H = Wd = 4

    # block 1: ConvT -> ReLU -> BatchNorm2d  (single fused kernel)
    colm, H, Wd = _upsample_pad_im2col(x, B, H, Wd, K, stride, 1)
    x = convt_relu_bn(colm, prep["w1"], prep["b1"], prep["g1"], prep["be1"])

    # block 2: ConvT -> ReLU -> BatchNorm2d  (single fused kernel)
    colm, H, Wd = _upsample_pad_im2col(x, B, H, Wd, K, stride, 1)
    x = convt_relu_bn(colm, prep["w2"], prep["b2"], prep["g2"], prep["be2"])

    # block 3: ConvT -> Tanh  (tiled over the 2048-long spatial axis, parallel)
    colm, H, Wd = _upsample_pad_im2col(x, B, H, Wd, K, stride, 1)
    y = convt_tanh(colm, prep["w3"], prep["b3"])                      # (nb, B*H*W)

    # single layout conversion to NCHW at the very end
    return y.reshape(nb_channels, B, H, Wd).transpose(1, 0, 2, 3)


if __name__ == "__main__":
    # Small, module-consistent shapes.
    BATCH = 2
    INPUT_SIZE = 32      # latent dim
    NUM_FILTERS = 16     # num_filters (//2 = 8)
    KERNEL_N = 4
    STRIDE = 2
    NB_CHANNELS = 3

    key = jax.random.PRNGKey(0)
    k_params, k_z = jax.random.split(key)
    params = init_params(k_params, INPUT_SIZE, NUM_FILTERS, KERNEL_N, NB_CHANNELS)
    prep = prepare_params(params)        # one-time weight re-layout (not per-step)
    z = jax.random.normal(k_z, (BATCH, INPUT_SIZE), jnp.float32)

    fwd = jax.jit(functools.partial(
        conv_generator_forward, num_filters=NUM_FILTERS, kernel_n=KERNEL_N,
        stride=STRIDE, nb_channels=NB_CHANNELS))
    out = jax.block_until_ready(fwd(z, prep))

    # Expected: (B, nb_channels, 32, 32) from 4x4 -> 8x8 -> 16x16 -> 32x32
    expected = (BATCH, NB_CHANNELS, 32, 32)
    assert out.shape == expected, (out.shape, expected)
    assert out.dtype == jnp.float32, out.dtype
    assert bool(jnp.all(jnp.isfinite(out)))
    # Tanh output range sanity check
    assert float(jnp.max(jnp.abs(out))) <= 1.0 + 1e-5

    print("KERNEL_OK")
</pallas_src>

<mosaic_0001>
module attributes {stable_mosaic.version = 11 : i64} {
  func.func @_fc_kernel(%arg0: i32, %arg1: memref<2x32xbf16, #tpu.memory_space<vmem>>, %arg2: memref<32x256xbf16, #tpu.memory_space<vmem>>, %arg3: memref<1x256xf32, #tpu.memory_space<vmem>>, %arg4: memref<2x256xbf16, #tpu.memory_space<vmem>>) attributes {dimension_semantics = [#tpu.dimension_semantics<arbitrary>], iteration_bounds = array<i64: 1>, scalar_prefetch = 0 : i64, scratch_operands = 0 : i64, tpu.core_type = #tpu.core_type<tc>, window_params = [{pipeline_mode = #tpu.pipeline_mode<synchronous>, transform_indices = @transform_0, window_bounds = array<i64: 2, 32>}, {pipeline_mode = #tpu.pipeline_mode<synchronous>, transform_indices = @transform_1, window_bounds = array<i64: 32, 256>}, {pipeline_mode = #tpu.pipeline_mode<synchronous>, transform_indices = @transform_2, window_bounds = array<i64: 1, 256>}, {pipeline_mode = #tpu.pipeline_mode<synchronous>, transform_indices = @transform_3, window_bounds = array<i64: 2, 256>}]} {
    %c0 = arith.constant 0 : index
    %c0_0 = arith.constant 0 : index
    %0 = vector.load %arg1[%c0, %c0_0] : memref<2x32xbf16, #tpu.memory_space<vmem>>, vector<2x32xbf16>
    %c0_1 = arith.constant 0 : index
    %c0_2 = arith.constant 0 : index
    %1 = vector.load %arg2[%c0_1, %c0_2] : memref<32x256xbf16, #tpu.memory_space<vmem>>, vector<32x256xbf16>
    %cst = arith.constant dense<0.000000e+00> : vector<2x256xf32>
    %2 = tpu.matmul %0, %1, %cst {dimension_numbers = #tpu.dot_dimension_numbers<[1], [0], [0], [1], [0, 0, 1, 1], [], []>} : vector<2x32xbf16>, vector<32x256xbf16>, vector<2x256xf32> -> vector<2x256xf32>
    %c0_3 = arith.constant 0 : index
    %c0_4 = arith.constant 0 : index
    %3 = vector.load %arg3[%c0_3, %c0_4] : memref<1x256xf32, #tpu.memory_space<vmem>>, vector<1x256xf32>
    %4 = vector.broadcast %3 : vector<1x256xf32> to vector<2x256xf32>
    %5 = arith.addf %2, %4 : vector<2x256xf32>
    %6 = arith.truncf %5 : vector<2x256xf32> to vector<2x256xbf16>
    %c0_5 = arith.constant 0 : index
    %c0_6 = arith.constant 0 : index
    %7 = vector.load %arg4[%c0_5, %c0_6] : memref<2x256xbf16, #tpu.memory_space<vmem>>, vector<2x256xbf16>
    tpu.vector_store %arg4[%c0_5, %c0_6], %6 {strides = array<i32>} : memref<2x256xbf16, #tpu.memory_space<vmem>>, vector<2x256xbf16>,
    return
  }
  func.func @transform_0(%arg0: i32) -> (i32, i32) {
    %c0_i32 = arith.constant 0 : i32
    %c0_i32_0 = arith.constant 0 : i32
    %c0_i32_1 = arith.constant 0 : i32
    return %c0_i32, %c0_i32_0 : i32, i32
  }
  func.func @transform_1(%arg0: i32) -> (i32, i32) {
    %c0_i32 = arith.constant 0 : i32
    %c0_i32_0 = arith.constant 0 : i32
    %c0_i32_1 = arith.constant 0 : i32
    return %c0_i32, %c0_i32_0 : i32, i32
  }
  func.func @transform_2(%arg0: i32) -> (i32, i32) {
    %c0_i32 = arith.constant 0 : i32
    %c0_i32_0 = arith.constant 0 : i32
    %c0_i32_1 = arith.constant 0 : i32
    return %c0_i32, %c0_i32_0 : i32, i32
  }
  func.func @transform_3(%arg0: i32) -> (i32, i32) {
    %c0_i32 = arith.constant 0 : i32
    %c0_i32_0 = arith.constant 0 : i32
    %c0_i32_1 = arith.constant 0 : i32
    return %c0_i32, %c0_i32_0 : i32, i32
  }
}

module attributes {stable_mosaic.version = 11 : i64} {
  func.func @_convt_relu_bn_kernel(%arg0: i32, %arg1: memref<256x128xbf16, #tpu.memory_space<vmem>>, %arg2: memref<16x256xbf16, #tpu.memory_space<vmem>>, %arg3: memref<16x1xf32, #tpu.memory_space<vmem>>, %arg4: memref<16x1xf32, #tpu.memory_space<vmem>>, %arg5: memref<16x1xf32, #tpu.memory_space<vmem>>, %arg6: memref<16x128xbf16, #tpu.memory_space<vmem>>) attributes {dimension_semantics = [#tpu.dimension_semantics<arbitrary>], iteration_bounds = array<i64: 1>, scalar_prefetch = 0 : i64, scratch_operands = 0 : i64, tpu.core_type = #tpu.core_type<tc>, window_params = [{pipeline_mode = #tpu.pipeline_mode<synchronous>, transform_indices = @transform_0, window_bounds = array<i64: 256, 128>}, {pipeline_mode = #tpu.pipeline_mode<synchronous>, transform_indices = @transform_1, window_bounds = array<i64: 16, 256>}, {pipeline_mode = #tpu.pipeline_mode<synchronous>, transform_indices = @transform_2, window_bounds = array<i64: 16, 1>}, {pipeline_mode = #tpu.pipeline_mode<synchronous>, transform_indices = @transform_3, window_bounds = array<i64: 16, 1>}, {pipeline_mode = #tpu.pipeline_mode<synchronous>, transform_indices = @transform_4, window_bounds = array<i64: 16, 1>}, {pipeline_mode = #tpu.pipeline_mode<synchronous>, transform_indices = @transform_5, window_bounds = array<i64: 16, 128>}]} {
    %c0 = arith.constant 0 : index
    %c0_0 = arith.constant 0 : index
    %0 = vector.load %arg2[%c0, %c0_0] : memref<16x256xbf16, #tpu.memory_space<vmem>>, vector<16x256xbf16>
    %c0_1 = arith.constant 0 : index
    %c0_2 = arith.constant 0 : index
    %1 = vector.load %arg1[%c0_1, %c0_2] : memref<256x128xbf16, #tpu.memory_space<vmem>>, vector<256x128xbf16>
    %cst = arith.constant dense<0.000000e+00> : vector<16x128xf32>
    %2 = tpu.matmul %0, %1, %cst {dimension_numbers = #tpu.dot_dimension_numbers<[1], [0], [0], [1], [0, 0, 1, 1], [], []>} : vector<16x256xbf16>, vector<256x128xbf16>, vector<16x128xf32> -> vector<16x128xf32>
    %c0_3 = arith.constant 0 : index
    %c0_4 = arith.constant 0 : index
    %3 = vector.load %arg3[%c0_3, %c0_4] : memref<16x1xf32, #tpu.memory_space<vmem>>, vector<16x1xf32>
    %4 = vector.broadcast %3 : vector<16x1xf32> to vector<16x128xf32>
    %5 = arith.addf %2, %4 : vector<16x128xf32>
    %cst_5 = arith.constant 0.000000e+00 : f32
    %6 = vector.broadcast %cst_5 : f32 to vector<16x128xf32>
    %7 = arith.maximumf %5, %6 : vector<16x128xf32>
    %cst_6 = arith.constant dense<0.000000e+00> : vector<16xf32>
    %8 = vector.multi_reduction <add>, %7, %cst_6 [1] : vector<16x128xf32> to vector<16xf32>
    %9 = vector.shape_cast %8 : vector<16xf32> to vector<16x1xf32>
    %cst_7 = arith.constant 7.812500e-03 : f32
    %10 = vector.broadcast %cst_7 : f32 to vector<16x1xf32>
    %11 = arith.mulf %9, %10 : vector<16x1xf32>
    %12 = vector.broadcast %11 : vector<16x1xf32> to vector<16x128xf32>
    %13 = arith.subf %7, %12 : vector<16x128xf32>
    %14 = arith.mulf %13, %13 : vector<16x128xf32>
    %cst_8 = arith.constant dense<0.000000e+00> : vector<16xf32>
    %15 = vector.multi_reduction <add>, %14, %cst_8 [1] : vector<16x128xf32> to vector<16xf32>
    %16 = vector.shape_cast %15 : vector<16xf32> to vector<16x1xf32>
    %cst_9 = arith.constant 7.812500e-03 : f32
    %17 = vector.broadcast %cst_9 : f32 to vector<16x1xf32>
    %18 = arith.mulf %16, %17 : vector<16x1xf32>
    %cst_10 = arith.constant 9.99999974E-6 : f32
    %19 = vector.broadcast %cst_10 : f32 to vector<16x1xf32>
    %20 = arith.addf %18, %19 : vector<16x1xf32>
    %21 = math.rsqrt %20 : vector<16x1xf32>
    %22 = vector.broadcast %21 : vector<16x1xf32> to vector<16x128xf32>
    %23 = arith.mulf %13, %22 : vector<16x128xf32>
    %c0_11 = arith.constant 0 : index
    %c0_12 = arith.constant 0 : index
    %24 = vector.load %arg4[%c0_11, %c0_12] : memref<16x1xf32, #tpu.memory_space<vmem>>, vector<16x1xf32>
    %25 = vector.broadcast %24 : vector<16x1xf32> to vector<16x128xf32>
    %26 = arith.mulf %23, %25 : vector<16x128xf32>
    %c0_13 = arith.constant 0 : index
    %c0_14 = arith.constant 0 : index
    %27 = vector.load %arg5[%c0_13, %c0_14] : memref<16x1xf32, #tpu.memory_space<vmem>>, vector<16x1xf32>
    %28 = vector.broadcast %27 : vector<16x1xf32> to vector<16x128xf32>
    %29 = arith.addf %26, %28 : vector<16x128xf32>
    %30 = arith.truncf %29 : vector<16x128xf32> to vector<16x128xbf16>
    %c0_15 = arith.constant 0 : index
    %c0_16 = arith.constant 0 : index
    %31 = vector.load %arg6[%c0_15, %c0_16] : memref<16x128xbf16, #tpu.memory_space<vmem>>, vector<16x128xbf16>
    tpu.vector_store %arg6[%c0_15, %c0_16], %30 {strides = array<i32>} : memref<16x128xbf16, #tpu.memory_space<vmem>>, vector<16x128xbf16>,
    return
  }
  func.func @transform_0(%arg0: i32) -> (i32, i32) {
    %c0_i32 = arith.constant 0 : i32
    %c0_i32_0 = arith.constant 0 : i32
    %c0_i32_1 = arith.constant 0 : i32
    return %c0_i32, %c0_i32_0 : i32, i32
  }
  func.func @transform_1(%arg0: i32) -> (i32, i32) {
    %c0_i32 = arith.constant 0 : i32
    %c0_i32_0 = arith.constant 0 : i32
    %c0_i32_1 = arith.constant 0 : i32
    return %c0_i32, %c0_i32_0 : i32, i32
  }
  func.func @transform_2(%arg0: i32) -> (i32, i32) {
    %c0_i32 = arith.constant 0 : i32
    %c0_i32_0 = arith.constant 0 : i32
    %c0_i32_1 = arith.constant 0 : i32
    return %c0_i32, %c0_i32_0 : i32, i32
  }
  func.func @transform_3(%arg0: i32) -> (i32, i32) {
    %c0_i32 = arith.constant 0 : i32
    %c0_i32_0 = arith.constant 0 : i32
    %c0_i32_1 = arith.constant 0 : i32
    return %c0_i32, %c0_i32_0 : i32, i32
  }
  func.func @transform_4(%arg0: i32) -> (i32, i32) {
    %c0_i32 = arith.constant 0 : i32
    %c0_i32_0 = arith.constant 0 : i32
    %c0_i32_1 = arith.constant 0 : i32
    return %c0_i32, %c0_i32_0 : i32, i32
  }
  func.func @transform_5(%arg0: i32) -> (i32, i32) {
    %c0_i32 = arith.constant 0 : i32
    %c0_i32_0 = arith.constant 0 : i32
    %c0_i32_1 = arith.constant 0 : i32
    return %c0_i32, %c0_i32_0 : i32, i32
  }
}

module attributes {stable_mosaic.version = 11 : i64} {
  func.func @_convt_relu_bn_kernel(%arg0: i32, %arg1: memref<256x512xbf16, #tpu.memory_space<vmem>>, %arg2: memref<8x256xbf16, #tpu.memory_space<vmem>>, %arg3: memref<8x1xf32, #tpu.memory_space<vmem>>, %arg4: memref<8x1xf32, #tpu.memory_space<vmem>>, %arg5: memref<8x1xf32, #tpu.memory_space<vmem>>, %arg6: memref<8x512xbf16, #tpu.memory_space<vmem>>) attributes {dimension_semantics = [#tpu.dimension_semantics<arbitrary>], iteration_bounds = array<i64: 1>, scalar_prefetch = 0 : i64, scratch_operands = 0 : i64, tpu.core_type = #tpu.core_type<tc>, window_params = [{pipeline_mode = #tpu.pipeline_mode<synchronous>, transform_indices = @transform_0, window_bounds = array<i64: 256, 512>}, {pipeline_mode = #tpu.pipeline_mode<synchronous>, transform_indices = @transform_1, window_bounds = array<i64: 8, 256>}, {pipeline_mode = #tpu.pipeline_mode<synchronous>, transform_indices = @transform_2, window_bounds = array<i64: 8, 1>}, {pipeline_mode = #tpu.pipeline_mode<synchronous>, transform_indices = @transform_3, window_bounds = array<i64: 8, 1>}, {pipeline_mode = #tpu.pipeline_mode<synchronous>, transform_indices = @transform_4, window_bounds = array<i64: 8, 1>}, {pipeline_mode = #tpu.pipeline_mode<synchronous>, transform_indices = @transform_5, window_bounds = array<i64: 8, 512>}]} {
    %c0 = arith.constant 0 : index
    %c0_0 = arith.constant 0 : index
    %0 = vector.load %arg2[%c0, %c0_0] : memref<8x256xbf16, #tpu.memory_space<vmem>>, vector<8x256xbf16>
    %c0_1 = arith.constant 0 : index
    %c0_2 = arith.constant 0 : index
    %1 = vector.load %arg1[%c0_1, %c0_2] : memref<256x512xbf16, #tpu.memory_space<vmem>>, vector<256x512xbf16>
    %cst = arith.constant dense<0.000000e+00> : vector<8x512xf32>
    %2 = tpu.matmul %0, %1, %cst {dimension_numbers = #tpu.dot_dimension_numbers<[1], [0], [0], [1], [0, 0, 1, 1], [], []>} : vector<8x256xbf16>, vector<256x512xbf16>, vector<8x512xf32> -> vector<8x512xf32>
    %c0_3 = arith.constant 0 : index
    %c0_4 = arith.constant 0 : index
    %3 = vector.load %arg3[%c0_3, %c0_4] : memref<8x1xf32, #tpu.memory_space<vmem>>, vector<8x1xf32>
    %4 = vector.broadcast %3 : vector<8x1xf32> to vector<8x512xf32>
    %5 = arith.addf %2, %4 : vector<8x512xf32>
    %cst_5 = arith.constant 0.000000e+00 : f32
    %6 = vector.broadcast %cst_5 : f32 to vector<8x512xf32>
    %7 = arith.maximumf %5, %6 : vector<8x512xf32>
    %cst_6 = arith.constant dense<0.000000e+00> : vector<8xf32>
    %8 = vector.multi_reduction <add>, %7, %cst_6 [1] : vector<8x512xf32> to vector<8xf32>
    %9 = vector.shape_cast %8 : vector<8xf32> to vector<8x1xf32>
    %cst_7 = arith.constant 0.001953125 : f32
    %10 = vector.broadcast %cst_7 : f32 to vector<8x1xf32>
    %11 = arith.mulf %9, %10 : vector<8x1xf32>
    %12 = vector.broadcast %11 : vector<8x1xf32> to vector<8x512xf32>
    %13 = arith.subf %7, %12 : vector<8x512xf32>
    %14 = arith.mulf %13, %13 : vector<8x512xf32>
    %cst_8 = arith.constant dense<0.000000e+00> : vector<8xf32>
    %15 = vector.multi_reduction <add>, %14, %cst_8 [1] : vector<8x512xf32> to vector<8xf32>
    %16 = vector.shape_cast %15 : vector<8xf32> to vector<8x1xf32>
    %cst_9 = arith.constant 0.001953125 : f32
    %17 = vector.broadcast %cst_9 : f32 to vector<8x1xf32>
    %18 = arith.mulf %16, %17 : vector<8x1xf32>
    %cst_10 = arith.constant 9.99999974E-6 : f32
    %19 = vector.broadcast %cst_10 : f32 to vector<8x1xf32>
    %20 = arith.addf %18, %19 : vector<8x1xf32>
    %21 = math.rsqrt %20 : vector<8x1xf32>
    %22 = vector.broadcast %21 : vector<8x1xf32> to vector<8x512xf32>
    %23 = arith.mulf %13, %22 : vector<8x512xf32>
    %c0_11 = arith.constant 0 : index
    %c0_12 = arith.constant 0 : index
    %24 = vector.load %arg4[%c0_11, %c0_12] : memref<8x1xf32, #tpu.memory_space<vmem>>, vector<8x1xf32>
    %25 = vector.broadcast %24 : vector<8x1xf32> to vector<8x512xf32>
    %26 = arith.mulf %23, %25 : vector<8x512xf32>
    %c0_13 = arith.constant 0 : index
    %c0_14 = arith.constant 0 : index
    %27 = vector.load %arg5[%c0_13, %c0_14] : memref<8x1xf32, #tpu.memory_space<vmem>>, vector<8x1xf32>
    %28 = vector.broadcast %27 : vector<8x1xf32> to vector<8x512xf32>
    %29 = arith.addf %26, %28 : vector<8x512xf32>
    %30 = arith.truncf %29 : vector<8x512xf32> to vector<8x512xbf16>
    %c0_15 = arith.constant 0 : index
    %c0_16 = arith.constant 0 : index
    %31 = vector.load %arg6[%c0_15, %c0_16] : memref<8x512xbf16, #tpu.memory_space<vmem>>, vector<8x512xbf16>
    tpu.vector_store %arg6[%c0_15, %c0_16], %30 {strides = array<i32>} : memref<8x512xbf16, #tpu.memory_space<vmem>>, vector<8x512xbf16>,
    return
  }
  func.func @transform_0(%arg0: i32) -> (i32, i32) {
    %c0_i32 = arith.constant 0 : i32
    %c0_i32_0 = arith.constant 0 : i32
    %c0_i32_1 = arith.constant 0 : i32
    return %c0_i32, %c0_i32_0 : i32, i32
  }
  func.func @transform_1(%arg0: i32) -> (i32, i32) {
    %c0_i32 = arith.constant 0 : i32
    %c0_i32_0 = arith.constant 0 : i32
    %c0_i32_1 = arith.constant 0 : i32
    return %c0_i32, %c0_i32_0 : i32, i32
  }
  func.func @transform_2(%arg0: i32) -> (i32, i32) {
    %c0_i32 = arith.constant 0 : i32
    %c0_i32_0 = arith.constant 0 : i32
    %c0_i32_1 = arith.constant 0 : i32
    return %c0_i32, %c0_i32_0 : i32, i32
  }
  func.func @transform_3(%arg0: i32) -> (i32, i32) {
    %c0_i32 = arith.constant 0 : i32
    %c0_i32_0 = arith.constant 0 : i32
    %c0_i32_1 = arith.constant 0 : i32
    return %c0_i32, %c0_i32_0 : i32, i32
  }
  func.func @transform_4(%arg0: i32) -> (i32, i32) {
    %c0_i32 = arith.constant 0 : i32
    %c0_i32_0 = arith.constant 0 : i32
    %c0_i32_1 = arith.constant 0 : i32
    return %c0_i32, %c0_i32_0 : i32, i32
  }
  func.func @transform_5(%arg0: i32) -> (i32, i32) {
    %c0_i32 = arith.constant 0 : i32
    %c0_i32_0 = arith.constant 0 : i32
    %c0_i32_1 = arith.constant 0 : i32
    return %c0_i32, %c0_i32_0 : i32, i32
  }
}

module attributes {stable_mosaic.version = 11 : i64} {
  func.func @_convt_tanh_kernel(%arg0: i32, %arg1: memref<128x512xbf16, #tpu.memory_space<vmem>>, %arg2: memref<3x128xbf16, #tpu.memory_space<vmem>>, %arg3: memref<3x1xf32, #tpu.memory_space<vmem>>, %arg4: memref<3x512xf32, #tpu.memory_space<vmem>>) attributes {dimension_semantics = [#tpu.dimension_semantics<parallel>], iteration_bounds = array<i64: 4>, scalar_prefetch = 0 : i64, scratch_operands = 0 : i64, tpu.core_type = #tpu.core_type<tc>, window_params = [{transform_indices = @transform_0, window_bounds = array<i64: 128, 512>}, {pipeline_mode = #tpu.pipeline_mode<synchronous>, transform_indices = @transform_1, window_bounds = array<i64: 3, 128>}, {pipeline_mode = #tpu.pipeline_mode<synchronous>, transform_indices = @transform_2, window_bounds = array<i64: 3, 1>}, {transform_indices = @transform_3, window_bounds = array<i64: 3, 512>}]} {
    %c0 = arith.constant 0 : index
    %c0_0 = arith.constant 0 : index
    %0 = vector.load %arg2[%c0, %c0_0] : memref<3x128xbf16, #tpu.memory_space<vmem>>, vector<3x128xbf16>
    %c0_1 = arith.constant 0 : index
    %c0_2 = arith.constant 0 : index
    %1 = vector.load %arg1[%c0_1, %c0_2] : memref<128x512xbf16, #tpu.memory_space<vmem>>, vector<128x512xbf16>
    %cst = arith.constant dense<0.000000e+00> : vector<3x512xf32>
    %2 = tpu.matmul %0, %1, %cst {dimension_numbers = #tpu.dot_dimension_numbers<[1], [0], [0], [1], [0, 0, 1, 1], [], []>} : vector<3x128xbf16>, vector<128x512xbf16>, vector<3x512xf32> -> vector<3x512xf32>
    %c0_3 = arith.constant 0 : index
    %c0_4 = arith.constant 0 : index
    %3 = vector.load %arg3[%c0_3, %c0_4] : memref<3x1xf32, #tpu.memory_space<vmem>>, vector<3x1xf32>
    %4 = vector.broadcast %3 : vector<3x1xf32> to vector<3x512xf32>
    %5 = arith.addf %2, %4 : vector<3x512xf32>
    %6 = math.tanh %5 : vector<3x512xf32>
    %c0_5 = arith.constant 0 : index
    %c0_6 = arith.constant 0 : index
    %7 = vector.load %arg4[%c0_5, %c0_6] : memref<3x512xf32, #tpu.memory_space<vmem>>, vector<3x512xf32>
    tpu.vector_store %arg4[%c0_5, %c0_6], %6 {strides = array<i32>} : memref<3x512xf32, #tpu.memory_space<vmem>>, vector<3x512xf32>,
    return
  }
  func.func @transform_0(%arg0: i32) -> (i32, i32) {
    %c0_i32 = arith.constant 0 : i32
    %c0_i32_0 = arith.constant 0 : i32
    return %c0_i32, %arg0 : i32, i32
  }
  func.func @transform_1(%arg0: i32) -> (i32, i32) {
    %c0_i32 = arith.constant 0 : i32
    %c0_i32_0 = arith.constant 0 : i32
    %c0_i32_1 = arith.constant 0 : i32
    return %c0_i32, %c0_i32_0 : i32, i32
  }
  func.func @transform_2(%arg0: i32) -> (i32, i32) {
    %c0_i32 = arith.constant 0 : i32
    %c0_i32_0 = arith.constant 0 : i32
    %c0_i32_1 = arith.constant 0 : i32
    return %c0_i32, %c0_i32_0 : i32, i32
  }
  func.func @transform_3(%arg0: i32) -> (i32, i32) {
    %c0_i32 = arith.constant 0 : i32
    %c0_i32_0 = arith.constant 0 : i32
    return %c0_i32, %arg0 : i32, i32
  }
}

</mosaic_0001>

<llo_original>
// kernel: conv_generator_forward.4
$region0: #{conv_generator_forward.4}
  #allocation0 [shape = 'u32[]', space=smem, size = 0x4, offset = 0x4, fixed_abs, tag = 'smem constant byte address 0x4 - core index']
  #allocation1 [shape = 'u32[144,128]{1,0:T(1,128)}', space=vmem, size = 0x12000, scoped, tag = 'internal scratch']
  %s0 = inlined_call_operand.vmem [shape: bf16[2,32], index: 0, kind: input, shape index: {}]
  %s1 = inlined_call_operand.hbm [shape: bf16[32,256], index: 1, kind: input, shape index: {}]
  %s2 = inlined_call_operand.hbm [shape: f32[1,256], index: 2, kind: input, shape index: {}]
  %s3 = inlined_call_operand.vmem [shape: bf16[2,256], index: 3, kind: output, shape index: {}]
  %s4 = sld [smem:[#allocation0]]
  $region30: #{conv_generator_forward.4} parent=0
    _
  %s6 = ssub.s32 1, %s4
  %s7 = scalar_select 0, %s6, %s4
  $region1: #{conv_generator_forward.4} parent=0
    #allocation2 [shape = 'u8[16384]{0}', space=vmem, size = 0x4000, scoped, tag = 'input window, operand 1, single buffered']
    #allocation3 [shape = 's32[1]{0}', space=sflag, size = 0x4, scoped, tag = 'scoped memory for conv_generator_forward.4']
    #allocation4 [shape = 'u8[1024]{0}', space=vmem, size = 0x400, scoped, tag = 'input window, operand 2, single buffered']
    #allocation5 [shape = 's32[1]{0}', space=sflag, size = 0x4, scoped, tag = 'scoped memory for conv_generator_forward.4']
    %8 = vsyncpa [#allocation3], 0
    %9 = vsyncpa [#allocation5], 0
    // Predicated region
    $region2: #{conv_generator_forward.4} parent=1 // pred_check
      _
    $region3: #{conv_generator_forward.4} parent=1 // pred_check_branch
      %11 = sbr.rel (0) target = $region5
    $region4: #{conv_generator_forward.4} parent=1 // pred_region
      _
    $region5: #{conv_generator_forward.4} parent=1 // pred_fallthru
      _
    // Predicated region
    $region6: #{conv_generator_forward.4} parent=1 // pred_check
      _
    $region7: #{conv_generator_forward.4} parent=1 // pred_check_branch
      %13 = sbr.rel (0) target = $region9
    $region8: #{conv_generator_forward.4} parent=1 // pred_region
      %s15 = ssub.s32 512, 512
      %16 = vsyncadd [#allocation3], %s15
      %s17 = sshll.u32 [#allocation2], 4
      %s18 = int_to_ptr.vmem [resolvable:$true] %s17
      %23 = dma.hbm_to_vmem [thread:$0]  %s1, 512, %s18, [#allocation3], 128, 128, 8
    $region9: #{conv_generator_forward.4} parent=1 // pred_fallthru
      _
    // Predicated region
    $region10: #{conv_generator_forward.4} parent=1 // pred_check
      _
    $region11: #{conv_generator_forward.4} parent=1 // pred_check_branch
      %25 = sbr.rel (0) target = $region13
    $region12: #{conv_generator_forward.4} parent=1 // pred_region
      %s27 = ssub.s32 32, 32
      %28 = vsyncadd [#allocation5], %s27
      %s30 = sshll.u32 [#allocation4], 4
      %s31 = int_to_ptr.vmem [resolvable:$true] %s30
      %33 = dma.hbm_to_vmem [thread:$0]  %s2, 32, %s31, [#allocation5]
    $region13: #{conv_generator_forward.4} parent=1 // pred_fallthru
      _
    // Predicated region
    $region14: #{conv_generator_forward.4} parent=1 // pred_check
      _
    $region15: #{conv_generator_forward.4} parent=1 // pred_check_branch
      %35 = sbr.rel (0) target = $region17
    $region16: #{conv_generator_forward.4} parent=1 // pred_region
      %36 = dma.done [#allocation3], 512
    $region17: #{conv_generator_forward.4} parent=1 // pred_fallthru
      _
    // Predicated region
    $region18: #{conv_generator_forward.4} parent=1 // pred_check
      _
    $region19: #{conv_generator_forward.4} parent=1 // pred_check_branch
      %38 = sbr.rel (0) target = $region21
    $region20: #{conv_generator_forward.4} parent=1 // pred_region
      %39 = dma.done [#allocation5], 32
    $region21: #{conv_generator_forward.4} parent=1 // pred_fallthru
      _
    %v41 = vld [vmem:[%s0] sm:$0x1]
    %v42 = vld [vmem:[#allocation2] sm:$0xff]
    %v43 = vld [vmem:[#allocation2 + $0x8] sm:$0xff]
    %v44 = vld [vmem:[#allocation2 + $0x10] sm:$0xff]
    %v45 = vld [vmem:[#allocation2 + $0x18] sm:$0xff]
    %v46 = vld [vmem:[#allocation4] sm:$0x3]
    %v48 = vlaneseq
    %v49 = vshrl.u32 %v48, 7
    %v50 = vsub.s32 0, %v49
    %v51 = vrot.slane %v46, %v50
    %v52 = vlaneseq
    %v53 = vshrl.u32 %v52, 7
    %v54 = vsub.s32 1, %v53
    %v55 = vrot.slane %v46, %v54
    %v62 = vunpack.c.l.b16 %v42
    %v63 = vunpack.c.h.b16 %v42
    %v64 = vunpack.c.l.b16 %v43
    %v65 = vunpack.c.h.b16 %v43
    %v66 = vunpack.c.l.b16 %v44
    %v67 = vunpack.c.h.b16 %v44
    %v68 = vunpack.c.l.b16 %v45
    %v69 = vunpack.c.h.b16 %v45
    %v70 = vpack.c.b16 %v64, %v62
    %v71 = vpack.c.b16 %v65, %v63
    %v72 = vpack.c.b16 %v68, %v66
    %v73 = vpack.c.b16 %v69, %v67
    %vm78 = vcmask 261120
    %v80 = vsel %vm78, %v41, 0
    %82 = vmatprep.subr.bf16.mxu0 %v71
    %83 = vmatpush1.bf16.msra.mxu0 %v70
    %84 = vmatprep.subr.bf16.mxu0 %v73
    %85 = vmatpush1.bf16.msra.mxu0 %v72
    %86 = vmatprep.subr.bf16.mxu0 0
    %87 = vmatpush1.bf16.msra.mxu0 0
    %88 = vmatprep.subr.bf16.mxu0 0
    %89 = vmatpush1.bf16.msra.mxu0 0
    %90 = vmatprep.subr.bf16.mxu0 0
    %91 = vmatpush1.bf16.msra.mxu0 0
    %92 = vmatprep.subr.bf16.mxu0 0
    %93 = vmatpush1.bf16.msra.mxu0 0
    %94 = vmatprep.subr.bf16.mxu0 0
    %95 = vmatpush1.bf16.msra.mxu0 0
    %96 = vmatprep.subr.bf16.mxu0 0
    %97 = vmatpush1.bf16.msra.mxu0 0
    %98 = vmatprep.subr.bf16.mxu0 0
    %99 = vmatpush1.bf16.msra.mxu0 0
    %100 = vmatprep.subr.bf16.mxu0 0
    %101 = vmatpush1.bf16.msra.mxu0 0
    %102 = vmatprep.subr.bf16.mxu0 0
    %103 = vmatpush1.bf16.msra.mxu0 0
    %104 = vmatprep.subr.bf16.mxu0 0
    %105 = vmatpush1.bf16.msra.mxu0 0
    %106 = vmatprep.subr.bf16.mxu0 0
    %107 = vmatpush1.bf16.msra.mxu0 0
    %108 = vmatprep.subr.bf16.mxu0 0
    %109 = vmatpush1.bf16.msra.mxu0 0
    %110 = vmatprep.subr.bf16.mxu0 0
    %111 = vmatpush1.bf16.msra.mxu0 0
    %112 = vmatprep.subr.bf16.mxu0 0
    %113 = vmatpush1.bf16.msra.mxu0 0
    %114 = vmatprep.mubr.bf16.mxu0 0
    %115 = vmatmul.mubr.bf16.gmra.mrb[0].mxu0 %v80
    %v116 = vpop.f32.mrb[0].mxu0
    %v117 = vadd.f32 %v51, %v116
    %v118 = vpop.f32.mrb[0].mxu0
    %v119 = vadd.f32 %v55, %v118
    %v120 = vpop.f32.mrb[0].mxu0
    %v121 = vpop.f32.mrb[0].mxu0
    %122 = vdwg.mxu0
    %v123 = vpack.c.bf16 %v117, %v117
    %v124 = vpack.c.bf16 %v119, %v119
    %v127 = vcombine.low %v123, %v124
    %v129 = vunpack.c.l.s4 1966171168
    %v130 = vunpack.c.0.s8 %v129
    %v131 = vlaneseq
    %v132 = vshrl.u32 %v131, 7
    %v133 = vsub.s32 %v130, %v132
    %v134 = vrot.slane %v127, %v133
    %v136 = vunpack.c.l.s4 1966171168
    %v137 = vunpack.c.0.s8 %v136
    %v138 = vlaneseq
    %v139 = vshrl.u32 %v138, 7
    %v140 = vsub.s32 %v137, %v139
    %v141 = vrot.slane %v134, %v140
    %143 = vst [vmem:[%s3] sm:$0x3] %v141
    // Predicated region
    $region22: #{conv_generator_forward.4} parent=1 // pred_check
      _
    $region23: #{conv_generator_forward.4} parent=1 // pred_check_branch
      %145 = sbr.rel (0) target = $region25
    $region24: #{conv_generator_forward.4} parent=1 // pred_region
      _
    $region25: #{conv_generator_forward.4} parent=1 // pred_fallthru
      _
    // Predicated region
    $region26: #{conv_generator_forward.4} parent=1 // pred_check
      _
    $region27: #{conv_generator_forward.4} parent=1 // pred_check_branch
      %147 = sbr.rel (0) target = $region29
    $region28: #{conv_generator_forward.4} parent=1 // pred_region
      _
    $region29: #{conv_generator_forward.4} parent=1 // pred_fallthru
      _
    %148 = vsyncpa [#allocation3], 1
    %149 = vsyncpa [#allocation5], 1

// kernel: conv_generator_forward.5
$region0: #{conv_generator_forward.5}
  #allocation0 [shape = 'u32[]', space=smem, size = 0x4, offset = 0x4, fixed_abs, tag = 'smem constant byte address 0x4 - core index']
  #allocation1 [shape = 'u32[144,128]{1,0:T(1,128)}', space=vmem, size = 0x12000, scoped, tag = 'internal scratch']
  %s0 = inlined_call_operand.vmem [shape: bf16[256,128], index: 0, kind: input, shape index: {}]
  %s1 = inlined_call_operand.vmem [shape: bf16[16,256], index: 1, kind: input, shape index: {}]
  %s2 = inlined_call_operand.vmem [shape: f32[16,1], index: 2, kind: input, shape index: {}]
  %s3 = inlined_call_operand.vmem [shape: f32[16,1], index: 3, kind: input, shape index: {}]
  %s4 = inlined_call_operand.vmem [shape: f32[16,1], index: 4, kind: input, shape index: {}]
  %s5 = inlined_call_operand.vmem [shape: bf16[16,128], index: 5, kind: output, shape index: {}]
  %s6 = sld [smem:[#allocation0]]
  $region30: #{conv_generator_forward.5} parent=0
    _
  %s8 = ssub.s32 1, %s6
  %s9 = scalar_select 0, %s8, %s6
  // Predicated region
  $region2: #{conv_generator_forward.5} parent=0 // pred_check
    _
  $region3: #{conv_generator_forward.5} parent=0 // pred_check_branch
    %11 = sbr.rel (0) target = $region5
  $region4: #{conv_generator_forward.5} parent=0 // pred_region
    _
  $region5: #{conv_generator_forward.5} parent=0 // pred_fallthru
    _
  // Predicated region
  $region6: #{conv_generator_forward.5} parent=0 // pred_check
    _
  $region7: #{conv_generator_forward.5} parent=0 // pred_check_branch
    %13 = sbr.rel (0) target = $region9
  $region8: #{conv_generator_forward.5} parent=0 // pred_region
    _
  $region9: #{conv_generator_forward.5} parent=0 // pred_fallthru
    _
  // Predicated region
  $region10: #{conv_generator_forward.5} parent=0 // pred_check
    _
  $region11: #{conv_generator_forward.5} parent=0 // pred_check_branch
    %15 = sbr.rel (0) target = $region13
  $region12: #{conv_generator_forward.5} parent=0 // pred_region
    _
  $region13: #{conv_generator_forward.5} parent=0 // pred_fallthru
    _
  // Predicated region
  $region14: #{conv_generator_forward.5} parent=0 // pred_check
    _
  $region15: #{conv_generator_forward.5} parent=0 // pred_check_branch
    %17 = sbr.rel (0) target = $region17
  $region16: #{conv_generator_forward.5} parent=0 // pred_region
    _
  $region17: #{conv_generator_forward.5} parent=0 // pred_fallthru
    _
  // Predicated region
  $region18: #{conv_generator_forward.5} parent=0 // pred_check
    _
  $region19: #{conv_generator_forward.5} parent=0 // pred_check_branch
    %19 = sbr.rel (0) target = $region21
  $region20: #{conv_generator_forward.5} parent=0 // pred_region
    _
  $region21: #{conv_generator_forward.5} parent=0 // pred_fallthru
    _
  %v21 = vld [vmem:[%s1] sm:$0xff]
  %v22 = vld [vmem:[%s1 + $0x8] sm:$0xff]
  %v23 = vld [vmem:[%s0] sm:$0xf]
  %v24 = vld [vmem:[%s0 + $0x4] sm:$0xf]
  %v25 = vld [vmem:[%s0 + $0x8] sm:$0xf]
  %v26 = vld [vmem:[%s0 + $0xc] sm:$0xf]
  %v27 = vld [vmem:[%s0 + $0x10] sm:$0xf]
  %v28 = vld [vmem:[%s0 + $0x14] sm:$0xf]
  %v29 = vld [vmem:[%s0 + $0x18] sm:$0xf]
  %v30 = vld [vmem:[%s0 + $0x1c] sm:$0xf]
  %v31 = vld [vmem:[%s0 + $0x20] sm:$0xf]
  %v32 = vld [vmem:[%s0 + $0x24] sm:$0xf]
  %v33 = vld [vmem:[%s0 + $0x28] sm:$0xf]
  %v34 = vld [vmem:[%s0 + $0x2c] sm:$0xf]
  %v35 = vld [vmem:[%s0 + $0x30] sm:$0xf]
  %v36 = vld [vmem:[%s0 + $0x34] sm:$0xf]
  %v37 = vld [vmem:[%s0 + $0x38] sm:$0xf]
  %v38 = vld [vmem:[%s0 + $0x3c] sm:$0xf]
  %v39 = vld [vmem:[%s0 + $0x40] sm:$0xf]
  %v40 = vld [vmem:[%s0 + $0x44] sm:$0xf]
  %v41 = vld [vmem:[%s0 + $0x48] sm:$0xf]
  %v42 = vld [vmem:[%s0 + $0x4c] sm:$0xf]
  %v43 = vld [vmem:[%s0 + $0x50] sm:$0xf]
  %v44 = vld [vmem:[%s0 + $0x54] sm:$0xf]
  %v45 = vld [vmem:[%s0 + $0x58] sm:$0xf]
  %v46 = vld [vmem:[%s0 + $0x5c] sm:$0xf]
  %v47 = vld [vmem:[%s0 + $0x60] sm:$0xf]
  %v48 = vld [vmem:[%s0 + $0x64] sm:$0xf]
  %v49 = vld [vmem:[%s0 + $0x68] sm:$0xf]
  %v50 = vld [vmem:[%s0 + $0x6c] sm:$0xf]
  %v51 = vld [vmem:[%s0 + $0x70] sm:$0xf]
  %v52 = vld [vmem:[%s0 + $0x74] sm:$0xf]
  %v53 = vld [vmem:[%s0 + $0x78] sm:$0xf]
  %v54 = vld [vmem:[%s0 + $0x7c] sm:$0xf]
  %v55 = vld [vmem:[%s2] sm:$0xff]
  %v56 = vld [vmem:[%s2 + $0x8] sm:$0xff]
  %58 = vset.pattern.permute.xlu0 0
  %59 = vperm.xlu0 %58, %v55
  %v60 = vpop.permute.xlu0 %59
  %63 = vset.pattern.permute.xlu0 0
  %64 = vperm.xlu0 %63, %v56
  %v65 = vpop.permute.xlu0 %64
  %v69 = vunpack.c.l.b16 %v21
  %v70 = vunpack.c.h.b16 %v21
  %v71 = vunpack.c.l.b16 %v22
  %v72 = vunpack.c.h.b16 %v22
  %v73 = vpack.c.b16 %v71, %v69
  %v74 = vpack.c.b16 %v72, %v70
  %v109 = vunpack.c.l.b16 %v23
  %v110 = vunpack.c.l.b16 %v24
  %v111 = vunpack.c.l.b16 %v25
  %v112 = vunpack.c.l.b16 %v26
  %v113 = vunpack.c.l.b16 %v27
  %v114 = vunpack.c.l.b16 %v28
  %v115 = vunpack.c.l.b16 %v29
  %v116 = vunpack.c.l.b16 %v30
  %v117 = vunpack.c.l.b16 %v31
  %v118 = vunpack.c.l.b16 %v32
  %v119 = vunpack.c.l.b16 %v33
  %v120 = vunpack.c.l.b16 %v34
  %v121 = vunpack.c.l.b16 %v35
  %v122 = vunpack.c.l.b16 %v36
  %v123 = vunpack.c.l.b16 %v37
  %v124 = vunpack.c.l.b16 %v38
  %v125 = vunpack.c.l.b16 %v39
  %v126 = vunpack.c.l.b16 %v40
  %v127 = vunpack.c.l.b16 %v41
  %v128 = vunpack.c.l.b16 %v42
  %v129 = vunpack.c.l.b16 %v43
  %v130 = vunpack.c.l.b16 %v44
  %v131 = vunpack.c.l.b16 %v45
  %v132 = vunpack.c.l.b16 %v46
  %v133 = vunpack.c.l.b16 %v47
  %v134 = vunpack.c.l.b16 %v48
  %v135 = vunpack.c.l.b16 %v49
  %v136 = vunpack.c.l.b16 %v50
  %v137 = vunpack.c.l.b16 %v51
  %v138 = vunpack.c.l.b16 %v52
  %v139 = vunpack.c.l.b16 %v53
  %v140 = vunpack.c.l.b16 %v54
  %v141 = vpack.c.b16 %v110, %v109
  %v142 = vpack.c.b16 %v112, %v111
  %v143 = vpack.c.b16 %v114, %v113
  %v144 = vpack.c.b16 %v116, %v115
  %v145 = vpack.c.b16 %v118, %v117
  %v146 = vpack.c.b16 %v120, %v119
  %v147 = vpack.c.b16 %v122, %v121
  %v148 = vpack.c.b16 %v124, %v123
  %v149 = vpack.c.b16 %v126, %v125
  %v150 = vpack.c.b16 %v128, %v127
  %v151 = vpack.c.b16 %v130, %v129
  %v152 = vpack.c.b16 %v132, %v131
  %v153 = vpack.c.b16 %v134, %v133
  %v154 = vpack.c.b16 %v136, %v135
  %v155 = vpack.c.b16 %v138, %v137
  %v156 = vpack.c.b16 %v140, %v139
  %173 = vmatprep.subr.bf16.mxu0 0
  %174 = vmatpush1.bf16.msra.mxu0 %v141
  %175 = vmatprep.subr.bf16.mxu0 0
  %176 = vmatpush1.bf16.msra.mxu0 %v142
  %177 = vmatprep.subr.bf16.mxu0 0
  %178 = vmatpush1.bf16.msra.mxu0 %v143
  %179 = vmatprep.subr.bf16.mxu0 0
  %180 = vmatpush1.bf16.msra.mxu0 %v144
  %181 = vmatprep.subr.bf16.mxu0 0
  %182 = vmatpush1.bf16.msra.mxu0 %v145
  %183 = vmatprep.subr.bf16.mxu0 0
  %184 = vmatpush1.bf16.msra.mxu0 %v146
  %185 = vmatprep.subr.bf16.mxu0 0
  %186 = vmatpush1.bf16.msra.mxu0 %v147
  %187 = vmatprep.subr.bf16.mxu0 0
  %188 = vmatpush1.bf16.msra.mxu0 %v148
  %189 = vmatprep.subr.bf16.mxu0 0
  %190 = vmatpush1.bf16.msra.mxu0 %v149
  %191 = vmatprep.subr.bf16.mxu0 0
  %192 = vmatpush1.bf16.msra.mxu0 %v150
  %193 = vmatprep.subr.bf16.mxu0 0
  %194 = vmatpush1.bf16.msra.mxu0 %v151
  %195 = vmatprep.subr.bf16.mxu0 0
  %196 = vmatpush1.bf16.msra.mxu0 %v152
  %197 = vmatprep.subr.bf16.mxu0 0
  %198 = vmatpush1.bf16.msra.mxu0 %v153
  %199 = vmatprep.subr.bf16.mxu0 0
  %200 = vmatpush1.bf16.msra.mxu0 %v154
  %201 = vmatprep.subr.bf16.mxu0 0
  %202 = vmatpush1.bf16.msra.mxu0 %v155
  %203 = vmatprep.subr.bf16.mxu0 0
  %204 = vmatpush1.bf16.msra.mxu0 %v156
  %205 = vmatprep.mubr.bf16.mxu0 %v74
  %206 = vmatmul.mubr.bf16.gmra.mrb[0].mxu0 %v73
  %v207 = vpop.f32.mrb[0].mxu0
  %v208 = vadd.f32 %v60, %v207
  %v209 = vpop.f32.mrb[0].mxu0
  %v210 = vpop.f32.mrb[0].mxu0
  %v211 = vadd.f32 %v65, %v210
  %v212 = vpop.f32.mrb[0].mxu0
  %213 = vdwg.mxu0
  %v214 = vmax.f32 %v208, 0.0
  %v215 = vmax.f32 %v211, 0.0
  %216 = vadd.xlane.f32.xlu0 %v214
  %v217 = vpop.xlane.xlu0 %216
  %218 = vadd.xlane.f32.xlu0 %v215
  %v219 = vpop.xlane.xlu0 %218
  %v220 = vmul.f32 %v217, 0.0078125
  %v221 = vmul.f32 %v219, 0.0078125
  %v222 = vsub.f32 %v214, %v220
  %v223 = vsub.f32 %v215, %v221
  %v224 = vmul.f32 %v222, %v222
  %v225 = vmul.f32 %v223, %v223
  %226 = vadd.xlane.f32.xlu0 %v224
  %v227 = vpop.xlane.xlu0 %226
  %228 = vadd.xlane.f32.xlu0 %v225
  %v229 = vpop.xlane.xlu0 %228
  %v230 = vmul.f32 %v227, 0.0078125
  %v231 = vmul.f32 %v229, 0.0078125
  %v232 = vadd.f32 %v230, 1e-05
  %v233 = vadd.f32 %v231, 1e-05
  %v234 = vrsqrt.pop %v232
  %v235 = vrsqrt.pop %v233
  %v236 = vmul.f32 %v222, %v234
  %v237 = vmul.f32 %v223, %v235
  %v238 = vld [vmem:[%s3] sm:$0xff]
  %v239 = vld [vmem:[%s3 + $0x8] sm:$0xff]
  %241 = vset.pattern.permute.xlu0 0
  %242 = vperm.xlu0 %241, %v238
  %v243 = vpop.permute.xlu0 %242
  %246 = vset.pattern.permute.xlu0 0
  %247 = vperm.xlu0 %246, %v239
  %v248 = vpop.permute.xlu0 %247
  %v250 = vmul.f32 %v236, %v243
  %v251 = vmul.f32 %v237, %v248
  %v252 = vld [vmem:[%s4] sm:$0xff]
  %v253 = vld [vmem:[%s4 + $0x8] sm:$0xff]
  %255 = vset.pattern.permute.xlu0 0
  %256 = vperm.xlu0 %255, %v252
  %v257 = vpop.permute.xlu0 %256
  %260 = vset.pattern.permute.xlu0 0
  %261 = vperm.xlu0 %260, %v253
  %v262 = vpop.permute.xlu0 %261
  %v264 = vadd.f32 %v250, %v257
  %v265 = vadd.f32 %v251, %v262
  %v266 = vpack.c.bf16 %v265, %v264
  %v268 = vunpack.c.l.b16 %v266
  %v269 = vunpack.c.h.b16 %v266
  %v270 = vpack.c.b16 %v268, %v268
  %v271 = vpack.c.b16 %v269, %v269
  %274 = vst [vmem:[%s5] sm:$0xf] %v270
  %275 = vst [vmem:[%s5 + $0x4] sm:$0xf] %v271
  // Predicated region
  $region22: #{conv_generator_forward.5} parent=0 // pred_check
    _
  $region23: #{conv_generator_forward.5} parent=0 // pred_check_branch
    %277 = sbr.rel (0) target = $region25
  $region24: #{conv_generator_forward.5} parent=0 // pred_region
    _
  $region25: #{conv_generator_forward.5} parent=0 // pred_fallthru
    _
  // Predicated region
  $region26: #{conv_generator_forward.5} parent=0 // pred_check
    _
  $region27: #{conv_generator_forward.5} parent=0 // pred_check_branch
    %279 = sbr.rel (0) target = $region29
  $region28: #{conv_generator_forward.5} parent=0 // pred_region
    _
  $region29: #{conv_generator_forward.5} parent=0 // pred_fallthru
    _

// kernel: conv_generator_forward.6
$region0: #{conv_generator_forward.6}
  #allocation0 [shape = 'u32[]', space=smem, size = 0x4, offset = 0x4, fixed_abs, tag = 'smem constant byte address 0x4 - core index']
  #allocation1 [shape = 'u32[144,128]{1,0:T(1,128)}', space=vmem, size = 0x12000, scoped, tag = 'internal scratch']
  %s0 = inlined_call_operand.vmem [shape: bf16[256,512], index: 0, kind: input, shape index: {}]
  %s1 = inlined_call_operand.vmem [shape: bf16[8,256], index: 1, kind: input, shape index: {}]
  %s2 = inlined_call_operand.vmem [shape: f32[8,1], index: 2, kind: input, shape index: {}]
  %s3 = inlined_call_operand.vmem [shape: f32[8,1], index: 3, kind: input, shape index: {}]
  %s4 = inlined_call_operand.vmem [shape: f32[8,1], index: 4, kind: input, shape index: {}]
  %s5 = inlined_call_operand.vmem [shape: bf16[8,512], index: 5, kind: output, shape index: {}]
  %s6 = sld [smem:[#allocation0]]
  $region30: #{conv_generator_forward.6} parent=0
    _
  %s8 = ssub.s32 1, %s6
  %s9 = scalar_select 0, %s8, %s6
  // Predicated region
  $region2: #{conv_generator_forward.6} parent=0 // pred_check
    _
  $region3: #{conv_generator_forward.6} parent=0 // pred_check_branch
    %11 = sbr.rel (0) target = $region5
  $region4: #{conv_generator_forward.6} parent=0 // pred_region
    _
  $region5: #{conv_generator_forward.6} parent=0 // pred_fallthru
    _
  // Predicated region
  $region6: #{conv_generator_forward.6} parent=0 // pred_check
    _
  $region7: #{conv_generator_forward.6} parent=0 // pred_check_branch
    %13 = sbr.rel (0) target = $region9
  $region8: #{conv_generator_forward.6} parent=0 // pred_region
    _
  $region9: #{conv_generator_forward.6} parent=0 // pred_fallthru
    _
  // Predicated region
  $region10: #{conv_generator_forward.6} parent=0 // pred_check
    _
  $region11: #{conv_generator_forward.6} parent=0 // pred_check_branch
    %15 = sbr.rel (0) target = $region13
  $region12: #{conv_generator_forward.6} parent=0 // pred_region
    _
  $region13: #{conv_generator_forward.6} parent=0 // pred_fallthru
    _
  // Predicated region
  $region14: #{conv_generator_forward.6} parent=0 // pred_check
    _
  $region15: #{conv_generator_forward.6} parent=0 // pred_check_branch
    %17 = sbr.rel (0) target = $region17
  $region16: #{conv_generator_forward.6} parent=0 // pred_region
    _
  $region17: #{conv_generator_forward.6} parent=0 // pred_fallthru
    _
  // Predicated region
  $region18: #{conv_generator_forward.6} parent=0 // pred_check
    _
  $region19: #{conv_generator_forward.6} parent=0 // pred_check_branch
    %19 = sbr.rel (0) target = $region21
  $region20: #{conv_generator_forward.6} parent=0 // pred_region
    _
  $region21: #{conv_generator_forward.6} parent=0 // pred_fallthru
    _
  %v20 = vld [vmem:[%s1] sm:$0xff]
  %v21 = vld [vmem:[%s0] sm:$0xff]
  %v22 = vld [vmem:[%s0 + $0x8] sm:$0xff]
  %v23 = vld [vmem:[%s0 + $0x10] sm:$0xff]
  %v24 = vld [vmem:[%s0 + $0x18] sm:$0xff]
  %v25 = vld [vmem:[%s0 + $0x20] sm:$0xff]
  %v26 = vld [vmem:[%s0 + $0x28] sm:$0xff]
  %v27 = vld [vmem:[%s0 + $0x30] sm:$0xff]
  %v28 = vld [vmem:[%s0 + $0x38] sm:$0xff]
  %v29 = vld [vmem:[%s0 + $0x40] sm:$0xff]
  %v30 = vld [vmem:[%s0 + $0x48] sm:$0xff]
  %v31 = vld [vmem:[%s0 + $0x50] sm:$0xff]
  %v32 = vld [vmem:[%s0 + $0x58] sm:$0xff]
  %v33 = vld [vmem:[%s0 + $0x60] sm:$0xff]
  %v34 = vld [vmem:[%s0 + $0x68] sm:$0xff]
  %v35 = vld [vmem:[%s0 + $0x70] sm:$0xff]
  %v36 = vld [vmem:[%s0 + $0x78] sm:$0xff]
  %v37 = vld [vmem:[%s0 + $0x80] sm:$0xff]
  %v38 = vld [vmem:[%s0 + $0x88] sm:$0xff]
  %v39 = vld [vmem:[%s0 + $0x90] sm:$0xff]
  %v40 = vld [vmem:[%s0 + $0x98] sm:$0xff]
  %v41 = vld [vmem:[%s0 + $0xa0] sm:$0xff]
  %v42 = vld [vmem:[%s0 + $0xa8] sm:$0xff]
  %v43 = vld [vmem:[%s0 + $0xb0] sm:$0xff]
  %v44 = vld [vmem:[%s0 + $0xb8] sm:$0xff]
  %v45 = vld [vmem:[%s0 + $0xc0] sm:$0xff]
  %v46 = vld [vmem:[%s0 + $0xc8] sm:$0xff]
  %v47 = vld [vmem:[%s0 + $0xd0] sm:$0xff]
  %v48 = vld [vmem:[%s0 + $0xd8] sm:$0xff]
  %v49 = vld [vmem:[%s0 + $0xe0] sm:$0xff]
  %v50 = vld [vmem:[%s0 + $0xe8] sm:$0xff]
  %v51 = vld [vmem:[%s0 + $0xf0] sm:$0xff]
  %v52 = vld [vmem:[%s0 + $0xf8] sm:$0xff]
  %v53 = vld [vmem:[%s0 + $0x100] sm:$0xff]
  %v54 = vld [vmem:[%s0 + $0x108] sm:$0xff]
  %v55 = vld [vmem:[%s0 + $0x110] sm:$0xff]
  %v56 = vld [vmem:[%s0 + $0x118] sm:$0xff]
  %v57 = vld [vmem:[%s0 + $0x120] sm:$0xff]
  %v58 = vld [vmem:[%s0 + $0x128] sm:$0xff]
  %v59 = vld [vmem:[%s0 + $0x130] sm:$0xff]
  %v60 = vld [vmem:[%s0 + $0x138] sm:$0xff]
  %v61 = vld [vmem:[%s0 + $0x140] sm:$0xff]
  %v62 = vld [vmem:[%s0 + $0x148] sm:$0xff]
  %v63 = vld [vmem:[%s0 + $0x150] sm:$0xff]
  %v64 = vld [vmem:[%s0 + $0x158] sm:$0xff]
  %v65 = vld [vmem:[%s0 + $0x160] sm:$0xff]
  %v66 = vld [vmem:[%s0 + $0x168] sm:$0xff]
  %v67 = vld [vmem:[%s0 + $0x170] sm:$0xff]
  %v68 = vld [vmem:[%s0 + $0x178] sm:$0xff]
  %v69 = vld [vmem:[%s0 + $0x180] sm:$0xff]
  %v70 = vld [vmem:[%s0 + $0x188] sm:$0xff]
  %v71 = vld [vmem:[%s0 + $0x190] sm:$0xff]
  %v72 = vld [vmem:[%s0 + $0x198] sm:$0xff]
  %v73 = vld [vmem:[%s0 + $0x1a0] sm:$0xff]
  %v74 = vld [vmem:[%s0 + $0x1a8] sm:$0xff]
  %v75 = vld [vmem:[%s0 + $0x1b0] sm:$0xff]
  %v76 = vld [vmem:[%s0 + $0x1b8] sm:$0xff]
  %v77 = vld [vmem:[%s0 + $0x1c0] sm:$0xff]
  %v78 = vld [vmem:[%s0 + $0x1c8] sm:$0xff]
  %v79 = vld [vmem:[%s0 + $0x1d0] sm:$0xff]
  %v80 = vld [vmem:[%s0 + $0x1d8] sm:$0xff]
  %v81 = vld [vmem:[%s0 + $0x1e0] sm:$0xff]
  %v82 = vld [vmem:[%s0 + $0x1e8] sm:$0xff]
  %v83 = vld [vmem:[%s0 + $0x1f0] sm:$0xff]
  %v84 = vld [vmem:[%s0 + $0x1f8] sm:$0xff]
  %v85 = vld [vmem:[%s2] sm:$0xff]
  %87 = vset.pattern.permute.xlu0 0
  %88 = vperm.xlu0 %87, %v85
  %v89 = vpop.permute.xlu0 %88
  %v92 = vunpack.c.l.b16 %v20
  %v93 = vunpack.c.h.b16 %v20
  %v94 = vpack.c.b16 %v92, %v92
  %v95 = vpack.c.b16 %v93, %v93
  %v162 = vunpack.c.l.b16 %v21
  %v163 = vunpack.c.h.b16 %v21
  %v164 = vunpack.c.l.b16 %v22
  %v165 = vunpack.c.h.b16 %v22
  %v166 = vunpack.c.l.b16 %v23
  %v167 = vunpack.c.h.b16 %v23
  %v168 = vunpack.c.l.b16 %v24
  %v169 = vunpack.c.h.b16 %v24
  %v170 = vunpack.c.l.b16 %v25
  %v171 = vunpack.c.h.b16 %v25
  %v172 = vunpack.c.l.b16 %v26
  %v173 = vunpack.c.h.b16 %v26
  %v174 = vunpack.c.l.b16 %v27
  %v175 = vunpack.c.h.b16 %v27
  %v176 = vunpack.c.l.b16 %v28
  %v177 = vunpack.c.h.b16 %v28
  %v178 = vunpack.c.l.b16 %v29
  %v179 = vunpack.c.h.b16 %v29
  %v180 = vunpack.c.l.b16 %v30
  %v181 = vunpack.c.h.b16 %v30
  %v182 = vunpack.c.l.b16 %v31
  %v183 = vunpack.c.h.b16 %v31
  %v184 = vunpack.c.l.b16 %v32
  %v185 = vunpack.c.h.b16 %v32
  %v186 = vunpack.c.l.b16 %v33
  %v187 = vunpack.c.h.b16 %v33
  %v188 = vunpack.c.l.b16 %v34
  %v189 = vunpack.c.h.b16 %v34
  %v190 = vunpack.c.l.b16 %v35
  %v191 = vunpack.c.h.b16 %v35
  %v192 = vunpack.c.l.b16 %v36
  %v193 = vunpack.c.h.b16 %v36
  %v194 = vunpack.c.l.b16 %v37
  %v195 = vunpack.c.h.b16 %v37
  %v196 = vunpack.c.l.b16 %v38
  %v197 = vunpack.c.h.b16 %v38
  %v198 = vunpack.c.l.b16 %v39
  %v199 = vunpack.c.h.b16 %v39
  %v200 = vunpack.c.l.b16 %v40
  %v201 = vunpack.c.h.b16 %v40
  %v202 = vunpack.c.l.b16 %v41
  %v203 = vunpack.c.h.b16 %v41
  %v204 = vunpack.c.l.b16 %v42
  %v205 = vunpack.c.h.b16 %v42
  %v206 = vunpack.c.l.b16 %v43
  %v207 = vunpack.c.h.b16 %v43
  %v208 = vunpack.c.l.b16 %v44
  %v209 = vunpack.c.h.b16 %v44
  %v210 = vunpack.c.l.b16 %v45
  %v211 = vunpack.c.h.b16 %v45
  %v212 = vunpack.c.l.b16 %v46
  %v213 = vunpack.c.h.b16 %v46
  %v214 = vunpack.c.l.b16 %v47
  %v215 = vunpack.c.h.b16 %v47
  %v216 = vunpack.c.l.b16 %v48
  %v217 = vunpack.c.h.b16 %v48
  %v218 = vunpack.c.l.b16 %v49
  %v219 = vunpack.c.h.b16 %v49
  %v220 = vunpack.c.l.b16 %v50
  %v221 = vunpack.c.h.b16 %v50
  %v222 = vunpack.c.l.b16 %v51
  %v223 = vunpack.c.h.b16 %v51
  %v224 = vunpack.c.l.b16 %v52
  %v225 = vunpack.c.h.b16 %v52
  %v226 = vunpack.c.l.b16 %v53
  %v227 = vunpack.c.h.b16 %v53
  %v228 = vunpack.c.l.b16 %v54
  %v229 = vunpack.c.h.b16 %v54
  %v230 = vunpack.c.l.b16 %v55
  %v231 = vunpack.c.h.b16 %v55
  %v232 = vunpack.c.l.b16 %v56
  %v233 = vunpack.c.h.b16 %v56
  %v234 = vunpack.c.l.b16 %v57
  %v235 = vunpack.c.h.b16 %v57
  %v236 = vunpack.c.l.b16 %v58
  %v237 = vunpack.c.h.b16 %v58
  %v238 = vunpack.c.l.b16 %v59
  %v239 = vunpack.c.h.b16 %v59
  %v240 = vunpack.c.l.b16 %v60
  %v241 = vunpack.c.h.b16 %v60
  %v242 = vunpack.c.l.b16 %v61
  %v243 = vunpack.c.h.b16 %v61
  %v244 = vunpack.c.l.b16 %v62
  %v245 = vunpack.c.h.b16 %v62
  %v246 = vunpack.c.l.b16 %v63
  %v247 = vunpack.c.h.b16 %v63
  %v248 = vunpack.c.l.b16 %v64
  %v249 = vunpack.c.h.b16 %v64
  %v250 = vunpack.c.l.b16 %v65
  %v251 = vunpack.c.h.b16 %v65
  %v252 = vunpack.c.l.b16 %v66
  %v253 = vunpack.c.h.b16 %v66
  %v254 = vunpack.c.l.b16 %v67
  %v255 = vunpack.c.h.b16 %v67
  %v256 = vunpack.c.l.b16 %v68
  %v257 = vunpack.c.h.b16 %v68
  %v258 = vunpack.c.l.b16 %v69
  %v259 = vunpack.c.h.b16 %v69
  %v260 = vunpack.c.l.b16 %v70
  %v261 = vunpack.c.h.b16 %v70
  %v262 = vunpack.c.l.b16 %v71
  %v263 = vunpack.c.h.b16 %v71
  %v264 = vunpack.c.l.b16 %v72
  %v265 = vunpack.c.h.b16 %v72
  %v266 = vunpack.c.l.b16 %v73
  %v267 = vunpack.c.h.b16 %v73
  %v268 = vunpack.c.l.b16 %v74
  %v269 = vunpack.c.h.b16 %v74
  %v270 = vunpack.c.l.b16 %v75
  %v271 = vunpack.c.h.b16 %v75
  %v272 = vunpack.c.l.b16 %v76
  %v273 = vunpack.c.h.b16 %v76
  %v274 = vunpack.c.l.b16 %v77
  %v275 = vunpack.c.h.b16 %v77
  %v276 = vunpack.c.l.b16 %v78
  %v277 = vunpack.c.h.b16 %v78
  %v278 = vunpack.c.l.b16 %v79
  %v279 = vunpack.c.h.b16 %v79
  %v280 = vunpack.c.l.b16 %v80
  %v281 = vunpack.c.h.b16 %v80
  %v282 = vunpack.c.l.b16 %v81
  %v283 = vunpack.c.h.b16 %v81
  %v284 = vunpack.c.l.b16 %v82
  %v285 = vunpack.c.h.b16 %v82
  %v286 = vunpack.c.l.b16 %v83
  %v287 = vunpack.c.h.b16 %v83
  %v288 = vunpack.c.l.b16 %v84
  %v289 = vunpack.c.h.b16 %v84
  %v290 = vpack.c.b16 %v166, %v162
  %v291 = vpack.c.b16 %v167, %v163
  %v292 = vpack.c.b16 %v168, %v164
  %v293 = vpack.c.b16 %v169, %v165
  %v294 = vpack.c.b16 %v174, %v170
  %v295 = vpack.c.b16 %v175, %v171
  %v296 = vpack.c.b16 %v176, %v172
  %v297 = vpack.c.b16 %v177, %v173
  %v298 = vpack.c.b16 %v182, %v178
  %v299 = vpack.c.b16 %v183, %v179
  %v300 = vpack.c.b16 %v184, %v180
  %v301 = vpack.c.b16 %v185, %v181
  %v302 = vpack.c.b16 %v190, %v186
  %v303 = vpack.c.b16 %v191, %v187
  %v304 = vpack.c.b16 %v192, %v188
  %v305 = vpack.c.b16 %v193, %v189
  %v306 = vpack.c.b16 %v198, %v194
  %v307 = vpack.c.b16 %v199, %v195
  %v308 = vpack.c.b16 %v200, %v196
  %v309 = vpack.c.b16 %v201, %v197
  %v310 = vpack.c.b16 %v206, %v202
  %v311 = vpack.c.b16 %v207, %v203
  %v312 = vpack.c.b16 %v208, %v204
  %v313 = vpack.c.b16 %v209, %v205
  %v314 = vpack.c.b16 %v214, %v210
  %v315 = vpack.c.b16 %v215, %v211
  %v316 = vpack.c.b16 %v216, %v212
  %v317 = vpack.c.b16 %v217, %v213
  %v318 = vpack.c.b16 %v222, %v218
  %v319 = vpack.c.b16 %v223, %v219
  %v320 = vpack.c.b16 %v224, %v220
  %v321 = vpack.c.b16 %v225, %v221
  %v322 = vpack.c.b16 %v230, %v226
  %v323 = vpack.c.b16 %v231, %v227
  %v324 = vpack.c.b16 %v232, %v228
  %v325 = vpack.c.b16 %v233, %v229
  %v326 = vpack.c.b16 %v238, %v234
  %v327 = vpack.c.b16 %v239, %v235
  %v328 = vpack.c.b16 %v240, %v236
  %v329 = vpack.c.b16 %v241, %v237
  %v330 = vpack.c.b16 %v246, %v242
  %v331 = vpack.c.b16 %v247, %v243
  %v332 = vpack.c.b16 %v248, %v244
  %v333 = vpack.c.b16 %v249, %v245
  %v334 = vpack.c.b16 %v254, %v250
  %v335 = vpack.c.b16 %v255, %v251
  %v336 = vpack.c.b16 %v256, %v252
  %v337 = vpack.c.b16 %v257, %v253
  %v338 = vpack.c.b16 %v262, %v258
  %v339 = vpack.c.b16 %v263, %v259
  %v340 = vpack.c.b16 %v264, %v260
  %v341 = vpack.c.b16 %v265, %v261
  %v342 = vpack.c.b16 %v270, %v266
  %v343 = vpack.c.b16 %v271, %v267
  %v344 = vpack.c.b16 %v272, %v268
  %v345 = vpack.c.b16 %v273, %v269
  %v346 = vpack.c.b16 %v278, %v274
  %v347 = vpack.c.b16 %v279, %v275
  %v348 = vpack.c.b16 %v280, %v276
  %v349 = vpack.c.b16 %v281, %v277
  %v350 = vpack.c.b16 %v286, %v282
  %v351 = vpack.c.b16 %v287, %v283
  %v352 = vpack.c.b16 %v288, %v284
  %v353 = vpack.c.b16 %v289, %v285
  %418 = vmatprep.subr.bf16.mxu0 %v291
  %419 = vmatpush1.bf16.msra.mxu0 %v290
  %420 = vmatprep.subr.bf16.mxu0 %v295
  %421 = vmatpush1.bf16.msra.mxu0 %v294
  %422 = vmatprep.subr.bf16.mxu0 %v299
  %423 = vmatpush1.bf16.msra.mxu0 %v298
  %424 = vmatprep.subr.bf16.mxu0 %v303
  %425 = vmatpush1.bf16.msra.mxu0 %v302
  %426 = vmatprep.subr.bf16.mxu0 %v307
  %427 = vmatpush1.bf16.msra.mxu0 %v306
  %428 = vmatprep.subr.bf16.mxu0 %v311
  %429 = vmatpush1.bf16.msra.mxu0 %v310
  %430 = vmatprep.subr.bf16.mxu0 %v315
  %431 = vmatpush1.bf16.msra.mxu0 %v314
  %432 = vmatprep.subr.bf16.mxu0 %v319
  %433 = vmatpush1.bf16.msra.mxu0 %v318
  %434 = vmatprep.subr.bf16.mxu0 %v323
  %435 = vmatpush1.bf16.msra.mxu0 %v322
  %436 = vmatprep.subr.bf16.mxu0 %v327
  %437 = vmatpush1.bf16.msra.mxu0 %v326
  %438 = vmatprep.subr.bf16.mxu0 %v331
  %439 = vmatpush1.bf16.msra.mxu0 %v330
  %440 = vmatprep.subr.bf16.mxu0 %v335
  %441 = vmatpush1.bf16.msra.mxu0 %v334
  %442 = vmatprep.subr.bf16.mxu0 %v339
  %443 = vmatpush1.bf16.msra.mxu0 %v338
  %444 = vmatprep.subr.bf16.mxu0 %v343
  %445 = vmatpush1.bf16.msra.mxu0 %v342
  %446 = vmatprep.subr.bf16.mxu0 %v347
  %447 = vmatpush1.bf16.msra.mxu0 %v346
  %448 = vmatprep.subr.bf16.mxu0 %v351
  %449 = vmatpush1.bf16.msra.mxu0 %v350
  %450 = vmatprep.mubr.bf16.mxu0 %v95
  %451 = vmatmul.mubr.bf16.gmra.mrb[0].mxu0 %v94
  %v452 = vpop.f32.mrb[0].mxu0
  %v453 = vadd.f32 %v89, %v452
  %v454 = vpop.f32.mrb[0].mxu0
  %v455 = vadd.f32 %v89, %v454
  %v456 = vpop.f32.mrb[0].mxu0
  %v457 = vpop.f32.mrb[0].mxu0
  %458 = vdwg.mxu0
  %459 = vmatprep.subr.bf16.mxu0 %v293
  %460 = vmatpush1.bf16.msra.mxu0 %v292
  %461 = vmatprep.subr.bf16.mxu0 %v297
  %462 = vmatpush1.bf16.msra.mxu0 %v296
  %463 = vmatprep.subr.bf16.mxu0 %v301
  %464 = vmatpush1.bf16.msra.mxu0 %v300
  %465 = vmatprep.subr.bf16.mxu0 %v305
  %466 = vmatpush1.bf16.msra.mxu0 %v304
  %467 = vmatprep.subr.bf16.mxu0 %v309
  %468 = vmatpush1.bf16.msra.mxu0 %v308
  %469 = vmatprep.subr.bf16.mxu0 %v313
  %470 = vmatpush1.bf16.msra.mxu0 %v312
  %471 = vmatprep.subr.bf16.mxu0 %v317
  %472 = vmatpush1.bf16.msra.mxu0 %v316
  %473 = vmatprep.subr.bf16.mxu0 %v321
  %474 = vmatpush1.bf16.msra.mxu0 %v320
  %475 = vmatprep.subr.bf16.mxu0 %v325
  %476 = vmatpush1.bf16.msra.mxu0 %v324
  %477 = vmatprep.subr.bf16.mxu0 %v329
  %478 = vmatpush1.bf16.msra.mxu0 %v328
  %479 = vmatprep.subr.bf16.mxu0 %v333
  %480 = vmatpush1.bf16.msra.mxu0 %v332
  %481 = vmatprep.subr.bf16.mxu0 %v337
  %482 = vmatpush1.bf16.msra.mxu0 %v336
  %483 = vmatprep.subr.bf16.mxu0 %v341
  %484 = vmatpush1.bf16.msra.mxu0 %v340
  %485 = vmatprep.subr.bf16.mxu0 %v345
  %486 = vmatpush1.bf16.msra.mxu0 %v344
  %487 = vmatprep.subr.bf16.mxu0 %v349
  %488 = vmatpush1.bf16.msra.mxu0 %v348
  %489 = vmatprep.subr.bf16.mxu0 %v353
  %490 = vmatpush1.bf16.msra.mxu0 %v352
  %491 = vmatprep.mubr.bf16.mxu0 %v95
  %492 = vmatmul.mubr.bf16.gmra.mrb[0].mxu0 %v94
  %v493 = vpop.f32.mrb[0].mxu0
  %v494 = vadd.f32 %v89, %v493
  %v495 = vpop.f32.mrb[0].mxu0
  %v496 = vadd.f32 %v89, %v495
  %v497 = vpop.f32.mrb[0].mxu0
  %v498 = vpop.f32.mrb[0].mxu0
  %499 = vdwg.mxu0
  %v500 = vmax.f32 %v453, 0.0
  %v501 = vmax.f32 %v455, 0.0
  %v502 = vmax.f32 %v494, 0.0
  %v503 = vmax.f32 %v496, 0.0
  %v504 = vadd.f32 %v500, %v501
  %v505 = vadd.f32 %v504, %v502
  %v506 = vadd.f32 %v505, %v503
  %507 = vadd.xlane.f32.xlu0 %v506
  %v508 = vpop.xlane.xlu0 %507
  %v509 = vmul.f32 %v508, 0.001953125
  %v510 = vsub.f32 %v500, %v509
  %v511 = vsub.f32 %v501, %v509
  %v512 = vsub.f32 %v502, %v509
  %v513 = vsub.f32 %v503, %v509
  %v514 = vmul.f32 %v510, %v510
  %v515 = vmul.f32 %v511, %v511
  %v516 = vmul.f32 %v512, %v512
  %v517 = vmul.f32 %v513, %v513
  %v518 = vadd.f32 %v514, %v515
  %v519 = vadd.f32 %v518, %v516
  %v520 = vadd.f32 %v519, %v517
  %521 = vadd.xlane.f32.xlu0 %v520
  %v522 = vpop.xlane.xlu0 %521
  %v523 = vmul.f32 %v522, 0.001953125
  %v524 = vadd.f32 %v523, 1e-05
  %v525 = vrsqrt.pop %v524
  %v526 = vmul.f32 %v510, %v525
  %v527 = vmul.f32 %v511, %v525
  %v528 = vmul.f32 %v512, %v525
  %v529 = vmul.f32 %v513, %v525
  %v530 = vld [vmem:[%s3] sm:$0xff]
  %532 = vset.pattern.permute.xlu0 0
  %533 = vperm.xlu0 %532, %v530
  %v534 = vpop.permute.xlu0 %533
  %v536 = vmul.f32 %v526, %v534
  %v537 = vmul.f32 %v527, %v534
  %v538 = vmul.f32 %v528, %v534
  %v539 = vmul.f32 %v529, %v534
  %v540 = vld [vmem:[%s4] sm:$0xff]
  %542 = vset.pattern.permute.xlu0 0
  %543 = vperm.xlu0 %542, %v540
  %v544 = vpop.permute.xlu0 %543
  %v546 = vadd.f32 %v536, %v544
  %v547 = vadd.f32 %v537, %v544
  %v548 = vadd.f32 %v538, %v544
  %v549 = vadd.f32 %v539, %v544
  %v550 = vpack.c.bf16 %v546, %v546
  %v551 = vpack.c.bf16 %v547, %v547
  %v552 = vpack.c.bf16 %v548, %v548
  %v553 = vpack.c.bf16 %v549, %v549
  %v558 = vunpack.c.l.b16 %v550
  %v559 = vunpack.c.l.b16 %v551
  %v560 = vunpack.c.l.b16 %v552
  %v561 = vunpack.c.l.b16 %v553
  %v562 = vpack.c.b16 %v559, %v558
  %v563 = vpack.c.b16 %v561, %v560
  %566 = vst [vmem:[%s5] sm:$0xff] %v562
  %567 = vst [vmem:[%s5 + $0x8] sm:$0xff] %v563
  // Predicated region
  $region22: #{conv_generator_forward.6} parent=0 // pred_check
    _
  $region23: #{conv_generator_forward.6} parent=0 // pred_check_branch
    %569 = sbr.rel (0) target = $region25
  $region24: #{conv_generator_forward.6} parent=0 // pred_region
    _
  $region25: #{conv_generator_forward.6} parent=0 // pred_fallthru
    _
  // Predicated region
  $region26: #{conv_generator_forward.6} parent=0 // pred_check
    _
  $region27: #{conv_generator_forward.6} parent=0 // pred_check_branch
    %571 = sbr.rel (0) target = $region29
  $region28: #{conv_generator_forward.6} parent=0 // pred_region
    _
  $region29: #{conv_generator_forward.6} parent=0 // pred_fallthru
    _

// kernel: conv_generator_forward.7
$region0: #{conv_generator_forward.7}
  #allocation0 [shape = 'u32[]', space=smem, size = 0x4, offset = 0x4, fixed_abs, tag = 'smem constant byte address 0x4 - core index']
  #allocation1 [shape = 'u32[144,128]{1,0:T(1,128)}', space=vmem, size = 0x12000, scoped, tag = 'internal scratch']
  %s0 = inlined_call_operand.vmem [shape: bf16[128,2048], index: 0, kind: input, shape index: {}]
  %s1 = inlined_call_operand.vmem [shape: bf16[3,128], index: 1, kind: input, shape index: {}]
  %s2 = inlined_call_operand.vmem [shape: f32[3,1], index: 2, kind: input, shape index: {}]
  %s3 = inlined_call_operand.vmem [shape: f32[3,2048], index: 3, kind: output, shape index: {}]
  %s4 = sld [smem:[#allocation0]]
  $region68: #{conv_generator_forward.7} parent=0
    _
  %s6 = ssub.s32 1, %s4
  %s7 = scalar_select 0, %s6, %s4
  $region1: #{conv_generator_forward.7} parent=0
    #allocation2 [shape = 'u8[262144]{0}', space=vmem, size = 0x40000, scoped, tag = 'input window, operand 0']
    loop: start=0, step=1, limit=6
    $region2: #{conv_generator_forward.7} parent=1 // loop_pre_header
      _
    $region3: #{conv_generator_forward.7} parent=1 // loop_header
      %s9 = sphi 0, %s13
      %p10 = scmp.ge.s32.totalorder %s9, 6
      %s19 = sphi 0, %s21
      %s22 = sphi 0, %s19
      %s23 = sphi 0, %s22
      %s39 = sphi 0, %s23
      %s43 = sphi 0, %s43
      %s45 = sphi 0, %s43
      %s46 = sphi 0, %s45
      %s60 = sphi 0, %s46
      %s64 = sphi 0, %s64
      %s66 = sphi 0, %s64
      %s67 = sphi 0, %s66
      %s81 = sphi 0, %s67
      %s87 = sphi 0, %s89
      %s90 = sphi 0, %s87
      %s91 = sphi 0, %s90
      %s107 = sphi 0, %s91
    $region4: #{conv_generator_forward.7} parent=1 // loop_header_branch
      %12 = sbr.rel (%p10) target = $region8
    $region5: #{conv_generator_forward.7} parent=1 // loop_body
      %s14 = ssub.s32 %s9, 1
      %s15 = ssub.s32 %s9, 2
      %s16 = sadd.s32 %s9, 1
      %s17 = ssub.s32 %s9, %s16
      %p18 = scmp.eq.s32.totalorder %s17, 0
      %s20 = sadd.s32 %s19, 1
      %s21 = scalar_select %p18, %s19, %s20
      %p24 = pneg %p18
      %p25 = scmp.eq.s32.totalorder %s9, 3
      %p26 = por %p24, %p25
      %p27 = scmp.ne.s32.totalorder %s19, %s22
      %p28 = scmp.eq.s32.totalorder %s9, 0
      %p29 = por %p27, %p28
      %p30 = scmp.ne.s32.totalorder %s19, %s22
      %p31 = scmp.eq.s32.totalorder %s14, 3
      %p32 = por %p30, %p31
      %p33 = scmp.ne.s32.totalorder %s22, %s23
      %p34 = scmp.eq.s32.totalorder %s14, 0
      %p35 = por %p33, %p34
      %p36 = scmp.ne.s32.totalorder %s22, %s23
      %p37 = scmp.eq.s32.totalorder %s15, 3
      %p38 = por %p36, %p37
      %p40 = scmp.ne.s32.totalorder %s23, %s39
      %p41 = scmp.eq.s32.totalorder %s15, 0
      %p42 = por %p40, %p41
      %s44 = sadd.s32 %s43, 1
      %p47 = scmp.eq.s32.totalorder %s9, 3
      %p48 = scmp.ne.s32.totalorder %s43, %s45
      %p49 = scmp.eq.s32.totalorder %s9, 0
      %p50 = por %p48, %p49
      %p51 = scmp.ne.s32.totalorder %s43, %s45
      %p52 = scmp.eq.s32.totalorder %s14, 3
      %p53 = por %p51, %p52
      %p54 = scmp.ne.s32.totalorder %s45, %s46
      %p55 = scmp.eq.s32.totalorder %s14, 0
      %p56 = por %p54, %p55
      %p57 = scmp.ne.s32.totalorder %s45, %s46
      %p58 = scmp.eq.s32.totalorder %s15, 3
      %p59 = por %p57, %p58
      %p61 = scmp.ne.s32.totalorder %s46, %s60
      %p62 = scmp.eq.s32.totalorder %s15, 0
      %p63 = por %p61, %p62
      %s65 = sadd.s32 %s64, 1
      %p68 = scmp.eq.s32.totalorder %s9, 3
      %p69 = scmp.ne.s32.totalorder %s64, %s66
      %p70 = scmp.eq.s32.totalorder %s9, 0
      %p71 = por %p69, %p70
      %p72 = scmp.ne.s32.totalorder %s64, %s66
      %p73 = scmp.eq.s32.totalorder %s14, 3
      %p74 = por %p72, %p73
      %p75 = scmp.ne.s32.totalorder %s66, %s67
      %p76 = scmp.eq.s32.totalorder %s14, 0
      %p77 = por %p75, %p76
      %p78 = scmp.ne.s32.totalorder %s66, %s67
      %p79 = scmp.eq.s32.totalorder %s15, 3
      %p80 = por %p78, %p79
      %p82 = scmp.ne.s32.totalorder %s67, %s81
      %p83 = scmp.eq.s32.totalorder %s15, 0
      %p84 = por %p82, %p83
      %s85 = ssub.s32 %s9, %s16
      %p86 = scmp.eq.s32.totalorder %s85, 0
      %s88 = sadd.s32 %s87, 1
      %s89 = scalar_select %p86, %s87, %s88
      %p92 = pneg %p86
      %p93 = scmp.eq.s32.totalorder %s9, 3
      %p94 = por %p92, %p93
      %p95 = scmp.ne.s32.totalorder %s87, %s90
      %p96 = scmp.eq.s32.totalorder %s9, 0
      %p97 = por %p95, %p96
      %p98 = scmp.ne.s32.totalorder %s87, %s90
      %p99 = scmp.eq.s32.totalorder %s14, 3
      %p100 = por %p98, %p99
      %p101 = scmp.ne.s32.totalorder %s90, %s91
      %p102 = scmp.eq.s32.totalorder %s14, 0
      %p103 = por %p101, %p102
      %p104 = scmp.ne.s32.totalorder %s90, %s91
      %p105 = scmp.eq.s32.totalorder %s15, 3
      %p106 = por %p104, %p105
      %p108 = scmp.ne.s32.totalorder %s91, %s107
      %p109 = scmp.eq.s32.totalorder %s15, 0
      %p110 = por %p108, %p109
      %p111 = scmp.le.s32.totalorder 1, %s9
      %p112 = scmp.lt.s32.totalorder %s9, 5
      %p113 = pnand %p111, %p112
      %p114 = pneg %p113
      // Predicated region
      $region9: #{conv_generator_forward.7} parent=5 // pred_check
        _
      $region10: #{conv_generator_forward.7} parent=5 // pred_check_branch
        %116 = sbr.rel (%p113) target = $region12
      $region11: #{conv_generator_forward.7} parent=5 // pred_region
        %s117 = ssub.s32 %s9, 1
        // Predicated region
        $region13: #{conv_generator_forward.7} parent=11 // pred_check
          %p118 = pneg %p56
        $region14: #{conv_generator_forward.7} parent=11 // pred_check_branch
          %120 = sbr.rel (%p118) target = $region16
        $region15: #{conv_generator_forward.7} parent=11 // pred_region
          _
        $region16: #{conv_generator_forward.7} parent=11 // pred_fallthru
          _
        // Predicated region
        $region17: #{conv_generator_forward.7} parent=11 // pred_check
          %p121 = pneg %p77
        $region18: #{conv_generator_forward.7} parent=11 // pred_check_branch
          %123 = sbr.rel (%p121) target = $region20
        $region19: #{conv_generator_forward.7} parent=11 // pred_region
          _
        $region20: #{conv_generator_forward.7} parent=11 // pred_fallthru
          _
      $region12: #{conv_generator_forward.7} parent=5 // pred_fallthru
        _
      %p124 = scmp.lt.s32.totalorder %s9, 4
      // Predicated region
      $region21: #{conv_generator_forward.7} parent=5 // pred_check
        %p125 = pneg %p124
      $region22: #{conv_generator_forward.7} parent=5 // pred_check_branch
        %127 = sbr.rel (%p125) target = $region24
      $region23: #{conv_generator_forward.7} parent=5 // pred_region
        // Predicated region
        $region25: #{conv_generator_forward.7} parent=23 // pred_check
          %p128 = pneg %p29
        $region26: #{conv_generator_forward.7} parent=23 // pred_check_branch
          %130 = sbr.rel (%p128) target = $region28
        $region27: #{conv_generator_forward.7} parent=23 // pred_region
          %s131 = sand.u32 %s19, 1
          %s132 = sand.u32 %s19, 1
          %s133 = smul.addr %s132, 256
          %s134 = scalar_lea.vmem [#allocation2], %s133
          %s135 = smul.u32 4, %s9
          %s136 = smul.addr %s135, 4
          %s137 = scalar_lea.vmem %s0, %s136
          // Predicated region
          $region29: #{conv_generator_forward.7} parent=27 // pred_check
            _
          $region30: #{conv_generator_forward.7} parent=27 // pred_check_branch
            %139 = sbr.rel (0) target = $region32
          $region31: #{conv_generator_forward.7} parent=27 // pred_region
            // Predicated region
            $region33: #{conv_generator_forward.7} parent=31 // pred_check
              _
            $region34: #{conv_generator_forward.7} parent=31 // pred_check_branch
              %141 = sbr.rel (0) target = $region36
            $region35: #{conv_generator_forward.7} parent=31 // pred_region
              loop: start=0, step=1, limit=1
              $region37: #{conv_generator_forward.7} parent=35 // loop_pre_header
                _
              $region38: #{conv_generator_forward.7} parent=35 // loop_header
                %s143 = sphi 0, %s147
                %p144 = scmp.ge.s32.totalorder %s143, 1
                %s148 = sphi %s137, %s137
                %s149 = sphi %s134, %s134
              $region39: #{conv_generator_forward.7} parent=35 // loop_header_branch
                %146 = sbr.rel (%p144) target = $region43
              $region40: #{conv_generator_forward.7} parent=35 // loop_body
                %v150 = vld [vmem:[%s148] sm:$0xff]
                %151 = vst [vmem:[%s149] sm:$0xff] %v150
                %v152 = vld [vmem:[%s148 + $0x8] sm:$0xff]
                %153 = vst [vmem:[%s149 + $0x8] sm:$0xff] %v152
                %v154 = vld [vmem:[%s148 + $0x40] sm:$0xff]
                %155 = vst [vmem:[%s149 + $0x10] sm:$0xff] %v154
                %v156 = vld [vmem:[%s148 + $0x48] sm:$0xff]
                %157 = vst [vmem:[%s149 + $0x18] sm:$0xff] %v156
                %v158 = vld [vmem:[%s148 + $0x80] sm:$0xff]
                %159 = vst [vmem:[%s149 + $0x20] sm:$0xff] %v158
                %v160 = vld [vmem:[%s148 + $0x88] sm:$0xff]
                %161 = vst [vmem:[%s149 + $0x28] sm:$0xff] %v160
                %v162 = vld [vmem:[%s148 + $0xc0] sm:$0xff]
                %163 = vst [vmem:[%s149 + $0x30] sm:$0xff] %v162
                %v164 = vld [vmem:[%s148 + $0xc8] sm:$0xff]
                %165 = vst [vmem:[%s149 + $0x38] sm:$0xff] %v164
                %v166 = vld [vmem:[%s148 + $0x100] sm:$0xff]
                %167 = vst [vmem:[%s149 + $0x40] sm:$0xff] %v166
                %v168 = vld [vmem:[%s148 + $0x108] sm:$0xff]
                %169 = vst [vmem:[%s149 + $0x48] sm:$0xff] %v168
                %v170 = vld [vmem:[%s148 + $0x140] sm:$0xff]
                %171 = vst [vmem:[%s149 + $0x50] sm:$0xff] %v170
                %v172 = vld [vmem:[%s148 + $0x148] sm:$0xff]
                %173 = vst [vmem:[%s149 + $0x58] sm:$0xff] %v172
                %v174 = vld [vmem:[%s148 + $0x180] sm:$0xff]
                %175 = vst [vmem:[%s149 + $0x60] sm:$0xff] %v174
                %v176 = vld [vmem:[%s148 + $0x188] sm:$0xff]
                %177 = vst [vmem:[%s149 + $0x68] sm:$0xff] %v176
                %v178 = vld [vmem:[%s148 + $0x1c0] sm:$0xff]
                %179 = vst [vmem:[%s149 + $0x70] sm:$0xff] %v178
                %v180 = vld [vmem:[%s148 + $0x1c8] sm:$0xff]
                %181 = vst [vmem:[%s149 + $0x78] sm:$0xff] %v180
                %v182 = vld [vmem:[%s148 + $0x200] sm:$0xff]
                %183 = vst [vmem:[%s149 + $0x80] sm:$0xff] %v182
                %v184 = vld [vmem:[%s148 + $0x208] sm:$0xff]
                %185 = vst [vmem:[%s149 + $0x88] sm:$0xff] %v184
                %v186 = vld [vmem:[%s148 + $0x240] sm:$0xff]
                %187 = vst [vmem:[%s149 + $0x90] sm:$0xff] %v186
                %v188 = vld [vmem:[%s148 + $0x248] sm:$0xff]
                %189 = vst [vmem:[%s149 + $0x98] sm:$0xff] %v188
                %v190 = vld [vmem:[%s148 + $0x280] sm:$0xff]
                %191 = vst [vmem:[%s149 + $0xa0] sm:$0xff] %v190
                %v192 = vld [vmem:[%s148 + $0x288] sm:$0xff]
                %193 = vst [vmem:[%s149 + $0xa8] sm:$0xff] %v192
                %v194 = vld [vmem:[%s148 + $0x2c0] sm:$0xff]
                %195 = vst [vmem:[%s149 + $0xb0] sm:$0xff] %v194
                %v196 = vld [vmem:[%s148 + $0x2c8] sm:$0xff]
                %197 = vst [vmem:[%s149 + $0xb8] sm:$0xff] %v196
                %v198 = vld [vmem:[%s148 + $0x300] sm:$0xff]
                %199 = vst [vmem:[%s149 + $0xc0] sm:$0xff] %v198
                %v200 = vld [vmem:[%s148 + $0x308] sm:$0xff]
                %201 = vst [vmem:[%s149 + $0xc8] sm:$0xff] %v200
                %v202 = vld [vmem:[%s148 + $0x340] sm:$0xff]
                %203 = vst [vmem:[%s149 + $0xd0] sm:$0xff] %v202
                %v204 = vld [vmem:[%s148 + $0x348] sm:$0xff]
                %205 = vst [vmem:[%s149 + $0xd8] sm:$0xff] %v204
                %v206 = vld [vmem:[%s148 + $0x380] sm:$0xff]
                %207 = vst [vmem:[%s149 + $0xe0] sm:$0xff] %v206
                %v208 = vld [vmem:[%s148 + $0x388] sm:$0xff]
                %209 = vst [vmem:[%s149 + $0xe8] sm:$0xff] %v208
                %v210 = vld [vmem:[%s148 + $0x3c0] sm:$0xff]
                %211 = vst [vmem:[%s149 + $0xf0] sm:$0xff] %v210
                %v212 = vld [vmem:[%s148 + $0x3c8] sm:$0xff]
                %213 = vst [vmem:[%s149 + $0xf8] sm:$0xff] %v212
              $region41: #{conv_generator_forward.7} parent=35 // loop_footer
                %s147 = sadd.s32 1, %s143
              $region42: #{conv_generator_forward.7} parent=35 // loop_footer_branch
                %142 = sbr.rel target = $region38
              $region43: #{conv_generator_forward.7} parent=35 // loop_exit
                _
            $region36: #{conv_generator_forward.7} parent=31 // pred_fallthru
              _
            // Predicated region
            $region44: #{conv_generator_forward.7} parent=31 // pred_check
              _
            $region45: #{conv_generator_forward.7} parent=31 // pred_check_branch
              %215 = sbr.rel target = $region47
            $region46: #{conv_generator_forward.7} parent=31 // pred_region
              _
            $region47: #{conv_generator_forward.7} parent=31 // pred_fallthru
              _
          $region32: #{conv_generator_forward.7} parent=27 // pred_fallthru
            _
          %216 = vnop
        $region28: #{conv_generator_forward.7} parent=23 // pred_fallthru
          _
      $region24: #{conv_generator_forward.7} parent=5 // pred_fallthru
        _
      %p217 = scmp.le.s32.totalorder 1, %s9
      %p218 = scmp.lt.s32.totalorder %s9, 5
      %p219 = pnand %p217, %p218
      %p220 = pneg %p219
      // Predicated region
      $region48: #{conv_generator_forward.7} parent=5 // pred_check
        _
      $region49: #{conv_generator_forward.7} parent=5 // pred_check_branch
        %222 = sbr.rel (%p219) target = $region51
      $region50: #{conv_generator_forward.7} parent=5 // pred_region
        %s223 = ssub.s32 %s9, 1
        %s224 = sand.u32 %s22, 1
        %s225 = sand.u32 %s22, 1
        %s226 = smul.addr %s225, 256
        %s227 = scalar_lea.vmem [#allocation2], %s226
        // Predicated region
        $region52: #{conv_generator_forward.7} parent=50 // pred_check
          %p228 = pneg %p35
        $region53: #{conv_generator_forward.7} parent=50 // pred_check_branch
          %230 = sbr.rel (%p228) target = $region55
        $region54: #{conv_generator_forward.7} parent=50 // pred_region
          _
        $region55: #{conv_generator_forward.7} parent=50 // pred_fallthru
          _
        %s231 = sand.u32 %s22, 1
        %s232 = sand.u32 %s22, 1
        %s233 = smul.addr %s232, 256
        %s234 = scalar_lea.vmem [#allocation2], %s233
        %p235 = pneg %p35
        %p236 = pneg %p32
        %p237 = pneg %p56
        %p238 = pneg %p53
        %p239 = pneg %p77
        %p240 = pneg %p74
        %p241 = pneg %p103
        %p242 = pneg %p100
        %s243 = smul.u32 4, %s14
        %p244 = scmp.lt.s32.totalorder %s243, 15
        %s245 = scalar_select %p244, %s243, 15
        %s246 = smul.addr %s245, 4
        %s247 = scalar_lea.vmem %s3, %s246
        %s248 = smul.u32 4, %s14
        %s249 = smul.u32 4, %s14
        %p250 = scmp.lt.s32.totalorder %s249, 15
        %s251 = scalar_select %p250, %s249, 15
        %s252 = smul.addr %s251, 4
        %s253 = scalar_lea.vmem %s3, %s252
        %s254 = smul.u32 4, %s14
        %v256 = vld [vmem:[%s1] sm:$0x3]
        %v257 = vld [vmem:[%s227] sm:$0xff]
        %v258 = vld [vmem:[%s227 + $0x8] sm:$0xff]
        %v259 = vld [vmem:[%s227 + $0x10] sm:$0xff]
        %v260 = vld [vmem:[%s227 + $0x18] sm:$0xff]
        %v261 = vld [vmem:[%s227 + $0x20] sm:$0xff]
        %v262 = vld [vmem:[%s227 + $0x28] sm:$0xff]
        %v263 = vld [vmem:[%s227 + $0x30] sm:$0xff]
        %v264 = vld [vmem:[%s227 + $0x38] sm:$0xff]
        %v265 = vld [vmem:[%s227 + $0x40] sm:$0xff]
        %v266 = vld [vmem:[%s227 + $0x48] sm:$0xff]
        %v267 = vld [vmem:[%s227 + $0x50] sm:$0xff]
        %v268 = vld [vmem:[%s227 + $0x58] sm:$0xff]
        %v269 = vld [vmem:[%s227 + $0x60] sm:$0xff]
        %v270 = vld [vmem:[%s227 + $0x68] sm:$0xff]
        %v271 = vld [vmem:[%s227 + $0x70] sm:$0xff]
        %v272 = vld [vmem:[%s227 + $0x78] sm:$0xff]
        %v273 = vld [vmem:[%s227 + $0x80] sm:$0xff]
        %v274 = vld [vmem:[%s227 + $0x88] sm:$0xff]
        %v275 = vld [vmem:[%s227 + $0x90] sm:$0xff]
        %v276 = vld [vmem:[%s227 + $0x98] sm:$0xff]
        %v277 = vld [vmem:[%s227 + $0xa0] sm:$0xff]
        %v278 = vld [vmem:[%s227 + $0xa8] sm:$0xff]
        %v279 = vld [vmem:[%s227 + $0xb0] sm:$0xff]
        %v280 = vld [vmem:[%s227 + $0xb8] sm:$0xff]
        %v281 = vld [vmem:[%s227 + $0xc0] sm:$0xff]
        %v282 = vld [vmem:[%s227 + $0xc8] sm:$0xff]
        %v283 = vld [vmem:[%s227 + $0xd0] sm:$0xff]
        %v284 = vld [vmem:[%s227 + $0xd8] sm:$0xff]
        %v285 = vld [vmem:[%s227 + $0xe0] sm:$0xff]
        %v286 = vld [vmem:[%s227 + $0xe8] sm:$0xff]
        %v287 = vld [vmem:[%s227 + $0xf0] sm:$0xff]
        %v288 = vld [vmem:[%s227 + $0xf8] sm:$0xff]
        %v289 = vld [vmem:[%s2] sm:$0x7]
        %291 = vset.pattern.permute.xlu0 0
        %292 = vperm.xlu0 %291, %v289
        %v293 = vpop.permute.xlu0 %292
        %v327 = vunpack.c.l.b16 %v257
        %v328 = vunpack.c.h.b16 %v257
        %v329 = vunpack.c.l.b16 %v258
        %v330 = vunpack.c.h.b16 %v258
        %v331 = vunpack.c.l.b16 %v259
        %v332 = vunpack.c.h.b16 %v259
        %v333 = vunpack.c.l.b16 %v260
        %v334 = vunpack.c.h.b16 %v260
        %v335 = vunpack.c.l.b16 %v261
        %v336 = vunpack.c.h.b16 %v261
        %v337 = vunpack.c.l.b16 %v262
        %v338 = vunpack.c.h.b16 %v262
        %v339 = vunpack.c.l.b16 %v263
        %v340 = vunpack.c.h.b16 %v263
        %v341 = vunpack.c.l.b16 %v264
        %v342 = vunpack.c.h.b16 %v264
        %v343 = vunpack.c.l.b16 %v265
        %v344 = vunpack.c.h.b16 %v265
        %v345 = vunpack.c.l.b16 %v266
        %v346 = vunpack.c.h.b16 %v266
        %v347 = vunpack.c.l.b16 %v267
        %v348 = vunpack.c.h.b16 %v267
        %v349 = vunpack.c.l.b16 %v268
        %v350 = vunpack.c.h.b16 %v268
        %v351 = vunpack.c.l.b16 %v269
        %v352 = vunpack.c.h.b16 %v269
        %v353 = vunpack.c.l.b16 %v270
        %v354 = vunpack.c.h.b16 %v270
        %v355 = vunpack.c.l.b16 %v271
        %v356 = vunpack.c.h.b16 %v271
        %v357 = vunpack.c.l.b16 %v272
        %v358 = vunpack.c.h.b16 %v272
        %v359 = vunpack.c.l.b16 %v273
        %v360 = vunpack.c.h.b16 %v273
        %v361 = vunpack.c.l.b16 %v274
        %v362 = vunpack.c.h.b16 %v274
        %v363 = vunpack.c.l.b16 %v275
        %v364 = vunpack.c.h.b16 %v275
        %v365 = vunpack.c.l.b16 %v276
        %v366 = vunpack.c.h.b16 %v276
        %v367 = vunpack.c.l.b16 %v277
        %v368 = vunpack.c.h.b16 %v277
        %v369 = vunpack.c.l.b16 %v278
        %v370 = vunpack.c.h.b16 %v278
        %v371 = vunpack.c.l.b16 %v279
        %v372 = vunpack.c.h.b16 %v279
        %v373 = vunpack.c.l.b16 %v280
        %v374 = vunpack.c.h.b16 %v280
        %v375 = vunpack.c.l.b16 %v281
        %v376 = vunpack.c.h.b16 %v281
        %v377 = vunpack.c.l.b16 %v282
        %v378 = vunpack.c.h.b16 %v282
        %v379 = vunpack.c.l.b16 %v283
        %v380 = vunpack.c.h.b16 %v283
        %v381 = vunpack.c.l.b16 %v284
        %v382 = vunpack.c.h.b16 %v284
        %v383 = vunpack.c.l.b16 %v285
        %v384 = vunpack.c.h.b16 %v285
        %v385 = vunpack.c.l.b16 %v286
        %v386 = vunpack.c.h.b16 %v286
        %v387 = vunpack.c.l.b16 %v287
        %v388 = vunpack.c.h.b16 %v287
        %v389 = vunpack.c.l.b16 %v288
        %v390 = vunpack.c.h.b16 %v288
        %v391 = vpack.c.b16 %v331, %v327
        %v392 = vpack.c.b16 %v332, %v328
        %v393 = vpack.c.b16 %v333, %v329
        %v394 = vpack.c.b16 %v334, %v330
        %v395 = vpack.c.b16 %v339, %v335
        %v396 = vpack.c.b16 %v340, %v336
        %v397 = vpack.c.b16 %v341, %v337
        %v398 = vpack.c.b16 %v342, %v338
        %v399 = vpack.c.b16 %v347, %v343
        %v400 = vpack.c.b16 %v348, %v344
        %v401 = vpack.c.b16 %v349, %v345
        %v402 = vpack.c.b16 %v350, %v346
        %v403 = vpack.c.b16 %v355, %v351
        %v404 = vpack.c.b16 %v356, %v352
        %v405 = vpack.c.b16 %v357, %v353
        %v406 = vpack.c.b16 %v358, %v354
        %v407 = vpack.c.b16 %v363, %v359
        %v408 = vpack.c.b16 %v364, %v360
        %v409 = vpack.c.b16 %v365, %v361
        %v410 = vpack.c.b16 %v366, %v362
        %v411 = vpack.c.b16 %v371, %v367
        %v412 = vpack.c.b16 %v372, %v368
        %v413 = vpack.c.b16 %v373, %v369
        %v414 = vpack.c.b16 %v374, %v370
        %v415 = vpack.c.b16 %v379, %v375
        %v416 = vpack.c.b16 %v380, %v376
        %v417 = vpack.c.b16 %v381, %v377
        %v418 = vpack.c.b16 %v382, %v378
        %v419 = vpack.c.b16 %v387, %v383
        %v420 = vpack.c.b16 %v388, %v384
        %v421 = vpack.c.b16 %v389, %v385
        %v422 = vpack.c.b16 %v390, %v386
        %455 = vmatprep.subr.bf16.mxu0 %v392
        %456 = vmatpush1.bf16.msra.mxu0 %v391
        %457 = vmatprep.subr.bf16.mxu0 %v396
        %458 = vmatpush1.bf16.msra.mxu0 %v395
        %459 = vmatprep.subr.bf16.mxu0 %v400
        %460 = vmatpush1.bf16.msra.mxu0 %v399
        %461 = vmatprep.subr.bf16.mxu0 %v404
        %462 = vmatpush1.bf16.msra.mxu0 %v403
        %463 = vmatprep.subr.bf16.mxu0 %v408
        %464 = vmatpush1.bf16.msra.mxu0 %v407
        %465 = vmatprep.subr.bf16.mxu0 %v412
        %466 = vmatpush1.bf16.msra.mxu0 %v411
        %467 = vmatprep.subr.bf16.mxu0 %v416
        %468 = vmatpush1.bf16.msra.mxu0 %v415
        %469 = vmatprep.subr.bf16.mxu0 %v420
        %470 = vmatpush1.bf16.msra.mxu0 %v419
        %471 = vmatprep.subr.bf16.mxu0 0
        %472 = vmatpush1.bf16.msra.mxu0 0
        %473 = vmatprep.subr.bf16.mxu0 0
        %474 = vmatpush1.bf16.msra.mxu0 0
        %475 = vmatprep.subr.bf16.mxu0 0
        %476 = vmatpush1.bf16.msra.mxu0 0
        %477 = vmatprep.subr.bf16.mxu0 0
        %478 = vmatpush1.bf16.msra.mxu0 0
        %479 = vmatprep.subr.bf16.mxu0 0
        %480 = vmatpush1.bf16.msra.mxu0 0
        %481 = vmatprep.subr.bf16.mxu0 0
        %482 = vmatpush1.bf16.msra.mxu0 0
        %483 = vmatprep.subr.bf16.mxu0 0
        %484 = vmatpush1.bf16.msra.mxu0 0
        %485 = vmatprep.subr.bf16.mxu0 0
        %486 = vmatpush1.bf16.msra.mxu0 0
        %487 = vmatprep.mubr.bf16.mxu0 0
        %488 = vmatmul.mubr.bf16.gmra.mrb[0].mxu0 %v256
        %v489 = vpop.f32.mrb[0].mxu0
        %v490 = vadd.f32 %v293, %v489
        %v491 = vpop.f32.mrb[0].mxu0
        %v492 = vadd.f32 %v293, %v491
        %v493 = vpop.f32.mrb[0].mxu0
        %v494 = vpop.f32.mrb[0].mxu0
        %495 = vdwg.mxu0
        %496 = vmatprep.subr.bf16.mxu0 %v394
        %497 = vmatpush1.bf16.msra.mxu0 %v393
        %498 = vmatprep.subr.bf16.mxu0 %v398
        %499 = vmatpush1.bf16.msra.mxu0 %v397
        %500 = vmatprep.subr.bf16.mxu0 %v402
        %501 = vmatpush1.bf16.msra.mxu0 %v401
        %502 = vmatprep.subr.bf16.mxu0 %v406
        %503 = vmatpush1.bf16.msra.mxu0 %v405
        %504 = vmatprep.subr.bf16.mxu0 %v410
        %505 = vmatpush1.bf16.msra.mxu0 %v409
        %506 = vmatprep.subr.bf16.mxu0 %v414
        %507 = vmatpush1.bf16.msra.mxu0 %v413
        %508 = vmatprep.subr.bf16.mxu0 %v418
        %509 = vmatpush1.bf16.msra.mxu0 %v417
        %510 = vmatprep.subr.bf16.mxu0 %v422
        %511 = vmatpush1.bf16.msra.mxu0 %v421
        %512 = vmatprep.subr.bf16.mxu0 0
        %513 = vmatpush1.bf16.msra.mxu0 0
        %514 = vmatprep.subr.bf16.mxu0 0
        %515 = vmatpush1.bf16.msra.mxu0 0
        %516 = vmatprep.subr.bf16.mxu0 0
        %517 = vmatpush1.bf16.msra.mxu0 0
        %518 = vmatprep.subr.bf16.mxu0 0
        %519 = vmatpush1.bf16.msra.mxu0 0
        %520 = vmatprep.subr.bf16.mxu0 0
        %521 = vmatpush1.bf16.msra.mxu0 0
        %522 = vmatprep.subr.bf16.mxu0 0
        %523 = vmatpush1.bf16.msra.mxu0 0
        %524 = vmatprep.subr.bf16.mxu0 0
        %525 = vmatpush1.bf16.msra.mxu0 0
        %526 = vmatprep.subr.bf16.mxu0 0
        %527 = vmatpush1.bf16.msra.mxu0 0
        %528 = vmatprep.mubr.bf16.mxu0 0
        %529 = vmatmul.mubr.bf16.gmra.mrb[0].mxu0 %v256
        %v530 = vpop.f32.mrb[0].mxu0
        %v531 = vadd.f32 %v293, %v530
        %v532 = vpop.f32.mrb[0].mxu0
        %v533 = vadd.f32 %v293, %v532
        %v534 = vpop.f32.mrb[0].mxu0
        %v535 = vpop.f32.mrb[0].mxu0
        %536 = vdwg.mxu0
        %v537 = vtanh.pop %v490
        %v538 = vtanh.pop %v492
        %v539 = vtanh.pop %v531
        %v540 = vtanh.pop %v533
        %v545 = vcombine.low %v537, %v538
        %v546 = vcombine.low %v539, %v540
        %549 = vst [vmem:[%s253] sm:$0x77] %v545
        %550 = vst [vmem:[%s253 + $0x8] sm:$0x77] %v546
        %s551 = smul.u32 4, %s14
        %p552 = scmp.lt.s32.totalorder %s551, 15
        %s553 = scalar_select %p552, %s551, 15
        %s554 = smul.addr %s553, 4
        %s555 = scalar_lea.vmem %s3, %s554
        // Predicated region
        $region56: #{conv_generator_forward.7} parent=50 // pred_check
          %p556 = pneg %p100
        $region57: #{conv_generator_forward.7} parent=50 // pred_check_branch
          %558 = sbr.rel (%p556) target = $region59
        $region58: #{conv_generator_forward.7} parent=50 // pred_region
          %s559 = smul.u32 4, %s14
        $region59: #{conv_generator_forward.7} parent=50 // pred_fallthru
          _
      $region51: #{conv_generator_forward.7} parent=5 // pred_fallthru
        _
      %p560 = scmp.le.s32.totalorder 2, %s9
      // Predicated region
      $region60: #{conv_generator_forward.7} parent=5 // pred_check
        %p561 = pneg %p560
      $region61: #{conv_generator_forward.7} parent=5 // pred_check_branch
        %563 = sbr.rel (%p561) target = $region63
      $region62: #{conv_generator_forward.7} parent=5 // pred_region
        %s564 = ssub.s32 %s9, 2
        // Predicated region
        $region64: #{conv_generator_forward.7} parent=62 // pred_check
          %p565 = pneg %p106
        $region65: #{conv_generator_forward.7} parent=62 // pred_check_branch
          %567 = sbr.rel (%p565) target = $region67
        $region66: #{conv_generator_forward.7} parent=62 // pred_region
          %s568 = smul.u32 4, %s15
          %p569 = scmp.lt.s32.totalorder %s568, 15
          %s570 = scalar_select %p569, %s568, 15
          %s571 = smul.addr %s570, 4
          %s572 = scalar_lea.vmem %s3, %s571
        $region67: #{conv_generator_forward.7} parent=62 // pred_fallthru
          _
      $region63: #{conv_generator_forward.7} parent=5 // pred_fallthru
        _
    $region6: #{conv_generator_forward.7} parent=1 // loop_footer
      %s13 = sadd.s32 1, %s9
    $region7: #{conv_generator_forward.7} parent=1 // loop_footer_branch
      %8 = sbr.rel target = $region3
    $region8: #{conv_generator_forward.7} parent=1 // loop_exit
      _

</llo_original>
